<compile_context>
chip_gen: v5e
topology: v5e:2x2
jax: 0.10.0
libtpu: 0.0.40
codegen_flags: <defaults>
</compile_context>

<pallas_src>
import functools

import jax
import jax.numpy as jnp
from jax import lax
from jax.experimental import pallas as pl
from jax.experimental.pallas import tpu as pltpu

COMMITMENT_COST = 0.25
DECAY = 0.99
EPSILON = 1e-5


def _round_up(x, m):
    return ((x + m - 1) // m) * m


def _default_num_parallel():
    # Only multi-TensorCore chips (v4 / v5p / v7x) benefit from a "parallel"
    # shard axis; on single-TC chips (v5e / v6e) it just duplicates the
    # (K, D) accumulator, its init pass and its writeback.
    try:
        kind = jax.devices()[0].device_kind.lower()
    except Exception:
        return 1
    if "v7" in kind or "v4" in kind or "v5p" in kind or "v5 p" in kind:
        return 2
    return 1


def _vq_kernel(x_ref, etn_ref, e2_ref, idx_ref, dw_ref, encsum_ref, *,
               n_valid, tile_n, n_tiles, num_k, k_chunk, needs_mask, exact_dw):
    i = pl.program_id(1)

    # Zero the per-core accumulators at the start of each reduction pass.
    @pl.when(i == 0)
    def _init():
        dw_ref[...] = jnp.zeros_like(dw_ref)
        encsum_ref[...] = jnp.zeros_like(encsum_ref)

    x = x_ref[...]                               # (TN, D) f32 activations tile
    x_b = x.astype(jnp.bfloat16)

    # ---- Pass 1: streaming (K-chunked) nearest-codebook search -------------
    # ||x||^2 is a per-row constant -> dropped (argmin invariant).  The -2 is
    # folded into the resident bf16 codebook^T, so dist = ||e||^2 + x @ (-2 e^T).
    run_min = None
    run_idx = None
    for cs in range(0, num_k, k_chunk):
        ce = min(cs + k_chunk, num_k)
        w = ce - cs
        xe = jnp.dot(x_b, etn_ref[:, cs:ce],
                     preferred_element_type=jnp.float32)        # (TN, w)  MXU
        dist = e2_ref[:, cs:ce] + xe                            # (TN, w)
        col = cs + lax.broadcasted_iota(jnp.int32, (1, w), 1)   # (1, w)
        cmin = jnp.min(dist, axis=1, keepdims=True)             # (TN, 1)
        # first-match tie-break within the chunk, same as torch.argmin
        cidx = jnp.min(jnp.where(dist == cmin, col, num_k),
                       axis=1, keepdims=True)                   # (TN, 1) int32
        if run_min is None:
            run_min, run_idx = cmin, cidx
        else:
            better = cmin < run_min          # strict: ties keep the lower index
            run_idx = jnp.where(better, cidx, run_idx)
            run_min = jnp.minimum(run_min, cmin)

    idx_ref[...] = run_idx                                      # (TN, 1) int32

    # Rows >= n_valid are zero-padding added by the wrapper.  Point their
    # index out of range so the one-hot below never matches (keeps enc_sum /
    # dw clean); their idx rows get sliced off outside.
    if needs_mask:
        row0 = (pl.program_id(0) * n_tiles + i) * tile_n
        rows = row0 + lax.broadcasted_iota(jnp.int32, (tile_n, 1), 0)
        idx_stat = jnp.where(rows < n_valid, run_idx, num_k)
    else:
        idx_stat = run_idx

    # ---- Pass 2: K-chunked one-hot matmul for dw and cluster counts --------
    for cs in range(0, num_k, k_chunk):
        ce = min(cs + k_chunk, num_k)
        w = ce - cs
        col = cs + lax.broadcasted_iota(jnp.int32, (1, w), 1)   # (1, w)
        hit_f32 = (col == idx_stat).astype(jnp.float32)         # (TN, w) 0/1
        encsum_ref[0, :, cs:ce] += jnp.sum(hit_f32, axis=0, keepdims=True)
        if exact_dw:
            contrib = lax.dot_general(
                hit_f32, x, (((0,), (0,)), ((), ())),
                preferred_element_type=jnp.float32,
                precision=lax.Precision.HIGHEST)                # (w, D)
        else:
            # one-hot is exact 0/1 in bf16 -> single-pass MXU, f32 accumulate.
            contrib = lax.dot_general(
                hit_f32.astype(jnp.bfloat16), x_b, (((0,), (0,)), ((), ())),
                preferred_element_type=jnp.float32)             # (w, D)
        dw_ref[0, cs:ce, :] += contrib


def vq_pallas(flat, emb, *, tile_n=256, k_chunk=256, num_parallel=None,
              exact_dw=False):
    """flat: (N, D) f32 activations, emb: (K, D) codebook.

    Returns (idx (N,) int32, dw (K, D) f32, enc_sum (K,) f32)."""
    n, d = flat.shape
    k = emb.shape[0]

    if num_parallel is None:
        num_parallel = _default_num_parallel()

    tn = min(_round_up(tile_n, 8), _round_up(n, 8))
    num_parallel = max(1, min(num_parallel, max(1, n // tn)))
    n_pad = _round_up(n, tn * num_parallel)
    n_tiles = n_pad // (tn * num_parallel)
    kc = max(1, min(k_chunk, k))

    flat = flat.astype(jnp.float32)
    if n_pad != n:
        flat = jnp.pad(flat, ((0, n_pad - n), (0, 0)))

    emb = emb.astype(jnp.float32)
    etn_bf16 = (-2.0 * emb.T).astype(jnp.bfloat16)   # (D, K) resident, -2 folded
    e2 = jnp.sum(emb * emb, axis=1)[None, :]         # (1, K) f32, hoisted

    kernel = functools.partial(
        _vq_kernel, n_valid=n, tile_n=tn, n_tiles=n_tiles, num_k=k,
        k_chunk=kc, needs_mask=(n_pad != n), exact_dw=exact_dw)

    row_map = lambda p, i: (p * n_tiles + i, 0)
    acc_map = lambda p, i: (p, 0, 0)
    res_map = lambda p, i: (0, 0)

    out_shape = (
        jax.ShapeDtypeStruct((n_pad, 1), jnp.int32),               # code indices
        jax.ShapeDtypeStruct((num_parallel, k, d), jnp.float32),   # dw partials
        jax.ShapeDtypeStruct((num_parallel, 1, k), jnp.float32),   # enc_sum partials
    )

    flops = 4 * n_pad * k * d                         # distance + dw matmuls
    bytes_accessed = (n_pad * d * 4 + d * k * 2 + k * 4          # reads
                      + n_pad * 4                                 # idx
                      + num_parallel * (k * d + k) * 4)           # accumulators

    idx_pad, dw_p, encsum_p = pl.pallas_call(
        kernel,
        out_shape=out_shape,
        grid_spec=pltpu.PrefetchScalarGridSpec(
            num_scalar_prefetch=0,
            grid=(num_parallel, n_tiles),
            in_specs=[
                pl.BlockSpec((tn, d), row_map),    # activations (pipelined)
                pl.BlockSpec((d, k), res_map),     # -2 * codebook^T bf16 (resident)
                pl.BlockSpec((1, k), res_map),     # ||e||^2 f32 (resident)
            ],
            out_specs=(
                pl.BlockSpec((tn, 1), row_map),
                pl.BlockSpec((1, k, d), acc_map),
                pl.BlockSpec((1, 1, k), acc_map),
            ),
        ),
        compiler_params=pltpu.CompilerParams(
            dimension_semantics=("parallel", "arbitrary"),
            vmem_limit_bytes=32 * 1024 * 1024),
        cost_estimate=pl.CostEstimate(flops=flops, transcendentals=0,
                                      bytes_accessed=bytes_accessed),
    )(flat, etn_bf16, e2)

    idx = idx_pad[:n, 0]
    dw = jnp.sum(dw_p, axis=0) if num_parallel > 1 else dw_p[0]
    enc_sum = (jnp.sum(encsum_p, axis=0) if num_parallel > 1 else encsum_p[0])[0]
    return idx, dw, enc_sum


def vector_quantizer_ema_forward(x_nchw, embedding_w, ema_cluster_size, ema_w,
                                 training=True):
    """Mirrors VectorQuantizerEMA.forward.  Inputs in NCHW, f32."""
    b, c, h, w = x_nchw.shape
    k, d = embedding_w.shape
    assert c == d, "channel dim must equal embedding_dim"

    inputs_nhwc = jnp.transpose(x_nchw, (0, 2, 3, 1))          # NCHW -> NHWC
    flat = inputs_nhwc.reshape(-1, d).astype(jnp.float32)
    n = flat.shape[0]

    embedding_w = embedding_w.astype(jnp.float32)
    idx, dw, enc_sum = vq_pallas(flat, embedding_w)

    # Exact f32 quantize: gather the selected codebook rows.  The kernel only
    # emits int32 indices (small writeback, no half-lane stores); the dense
    # one-hot returned by the module is rebuilt here, values are exact 0/1.
    q_flat = jnp.take(embedding_w, idx, axis=0)                # (N, D)
    encodings = jax.nn.one_hot(idx, k, dtype=jnp.float32)

    quantized_nhwc = q_flat.reshape(b, h, w, d)
    # TODO(synk): straight-through estimator is value-only here; wrap with
    # jax.custom_vjp if gradients through this op are required.
    quantized = jnp.transpose(quantized_nhwc, (0, 3, 1, 2))    # back to NCHW

    e_latent_loss = jnp.mean((q_flat - flat) ** 2)             # exact f32 MSE
    loss = COMMITMENT_COST * e_latent_loss
    avg_probs = enc_sum / float(n)
    perplexity = jnp.exp(-jnp.sum(avg_probs * jnp.log(avg_probs + 1e-10)))

    if training:
        new_cluster = ema_cluster_size * DECAY + (1.0 - DECAY) * enc_sum
        n_tot = jnp.sum(new_cluster)
        new_cluster = (new_cluster + EPSILON) / (n_tot + k * EPSILON) * n_tot
        new_ema_w = ema_w * DECAY + (1.0 - DECAY) * dw
        new_embedding_w = new_ema_w / new_cluster[:, None]
    else:
        new_cluster, new_ema_w, new_embedding_w = (
            ema_cluster_size, ema_w, embedding_w)

    # TODO(synk): nn.Embedding / nn.Parameter have no JAX equivalent; return the
    # (possibly EMA-updated) codebook weight array instead of the module.
    codebook_weight = new_embedding_w
    return (loss, quantized, perplexity, encodings, codebook_weight,
            new_cluster, new_ema_w, new_embedding_w)


if __name__ == "__main__":
    key = jax.random.PRNGKey(0)
    # Small demo shapes; D / K follow the module constants.
    B, H, W = 2, 8, 8
    D = 64        # embedding_dim
    K = 512       # num_embeddings

    k1, k2, k3 = jax.random.split(key, 3)
    x = jax.random.normal(k1, (B, D, H, W), dtype=jnp.float32)      # NCHW input
    embedding_w = jax.random.normal(k2, (K, D), dtype=jnp.float32)  # .normal_()
    ema_w = jax.random.normal(k3, (K, D), dtype=jnp.float32)        # .normal_()
    ema_cluster_size = jnp.zeros((K,), dtype=jnp.float32)           # zeros buffer

    outs = vector_quantizer_ema_forward(x, embedding_w, ema_cluster_size,
                                        ema_w, training=True)
    outs = jax.block_until_ready(outs)

    loss, quantized, perplexity, encodings = outs[0], outs[1], outs[2], outs[3]
    assert quantized.shape == (B, D, H, W)
    assert encodings.shape == (B * H * W, K)
    assert loss.shape == () and perplexity.shape == ()
    assert bool(jnp.isfinite(loss)) and bool(jnp.isfinite(perplexity))
    # every row of the reconstructed encodings must be exactly one-hot
    assert float(jnp.max(jnp.abs(jnp.sum(encodings, axis=1) - 1.0))) < 1e-6

    # Internal consistency of the fused kernel statistics with its own indices.
    flat = jnp.transpose(x, (0, 2, 3, 1)).reshape(-1, D)
    idx, dw, enc_sum = vq_pallas(flat, embedding_w)
    idx, dw, enc_sum = jax.block_until_ready((idx, dw, enc_sum))
    onehot = jax.nn.one_hot(idx, K, dtype=jnp.float32)
    assert bool(jnp.array_equal(enc_sum, jnp.sum(onehot, axis=0)))
    dw_exact = jnp.matmul(onehot.T, flat, precision=lax.Precision.HIGHEST)
    assert bool(jnp.allclose(dw, dw_exact, atol=5e-2, rtol=2e-2))

    # Exercise the row-padding / masking path (N not a multiple of the tile).
    idx2, dw2, es2 = vq_pallas(flat[:100], embedding_w)
    idx2, dw2, es2 = jax.block_until_ready((idx2, dw2, es2))
    assert abs(float(jnp.sum(es2)) - 100.0) < 1e-3
    assert bool(jnp.array_equal(idx2, idx[:100]))

    print("KERNEL_OK")
</pallas_src>

<mosaic_0001>
module attributes {stable_mosaic.version = 11 : i64} {
  func.func @_vq_kernel(%arg0: i32, %arg1: i32, %arg2: memref<128x64xf32, #tpu.memory_space<vmem>>, %arg3: memref<64x512xbf16, #tpu.memory_space<vmem>>, %arg4: memref<1x512xf32, #tpu.memory_space<vmem>>, %arg5: memref<128x1xi32, #tpu.memory_space<vmem>>, %arg6: memref<1x512x64xf32, #tpu.memory_space<vmem>>, %arg7: memref<1x1x512xf32, #tpu.memory_space<vmem>>) attributes {dimension_semantics = [#tpu.dimension_semantics<parallel>, #tpu.dimension_semantics<arbitrary>], iteration_bounds = array<i64: 1, 1>, scalar_prefetch = 0 : i64, scratch_operands = 0 : i64, tpu.core_type = #tpu.core_type<tc>, window_params = [{transform_indices = @transform_0, window_bounds = array<i64: 128, 64>}, {pipeline_mode = #tpu.pipeline_mode<synchronous>, transform_indices = @transform_1, window_bounds = array<i64: 64, 512>}, {pipeline_mode = #tpu.pipeline_mode<synchronous>, transform_indices = @transform_2, window_bounds = array<i64: 1, 512>}, {transform_indices = @transform_3, window_bounds = array<i64: 128, 1>}, {transform_indices = @transform_4, window_bounds = array<i64: 1, 512, 64>}, {transform_indices = @transform_5, window_bounds = array<i64: 1, 1, 512>}]} {
    %c0_i32 = arith.constant 0 : i32
    %0 = arith.cmpi eq, %arg1, %c0_i32 : i32
    %1 = arith.extui %0 : i1 to i32
    %c0_i32_0 = arith.constant 0 : i32
    %2 = arith.cmpi ne, %1, %c0_i32_0 : i32
    scf.if %2 {
      %cst_48 = arith.constant 0.000000e+00 : f32
      %92 = vector.broadcast %cst_48 : f32 to vector<1x512x64xf32>
      %c0_49 = arith.constant 0 : index
      %c0_50 = arith.constant 0 : index
      %c0_51 = arith.constant 0 : index
      %93 = vector.load %arg6[%c0_49, %c0_50, %c0_51] : memref<1x512x64xf32, #tpu.memory_space<vmem>>, vector<1x512x64xf32>
      tpu.vector_store %arg6[%c0_49, %c0_50, %c0_51], %92 {strides = array<i32>} : memref<1x512x64xf32, #tpu.memory_space<vmem>>, vector<1x512x64xf32>,
      %cst_52 = arith.constant 0.000000e+00 : f32
      %94 = vector.broadcast %cst_52 : f32 to vector<1x1x512xf32>
      %c0_53 = arith.constant 0 : index
      %c0_54 = arith.constant 0 : index
      %c0_55 = arith.constant 0 : index
      %95 = vector.load %arg7[%c0_53, %c0_54, %c0_55] : memref<1x1x512xf32, #tpu.memory_space<vmem>>, vector<1x1x512xf32>
      tpu.vector_store %arg7[%c0_53, %c0_54, %c0_55], %94 {strides = array<i32>} : memref<1x1x512xf32, #tpu.memory_space<vmem>>, vector<1x1x512xf32>,
    } else {
    }
    %c0 = arith.constant 0 : index
    %c0_1 = arith.constant 0 : index
    %3 = vector.load %arg2[%c0, %c0_1] : memref<128x64xf32, #tpu.memory_space<vmem>>, vector<128x64xf32>
    %4 = arith.truncf %3 : vector<128x64xf32> to vector<128x64xbf16>
    %c0_2 = arith.constant 0 : index
    %c0_3 = arith.constant 0 : index
    %5 = vector.load %arg3[%c0_2, %c0_3] : memref<64x512xbf16, #tpu.memory_space<vmem>>, vector<64x256xbf16>
    %cst = arith.constant dense<0.000000e+00> : vector<128x256xf32>
    %6 = tpu.matmul %4, %5, %cst {dimension_numbers = #tpu.dot_dimension_numbers<[1], [0], [0], [1], [0, 0, 1, 1], [], []>} : vector<128x64xbf16>, vector<64x256xbf16>, vector<128x256xf32> -> vector<128x256xf32>
    %c0_4 = arith.constant 0 : index
    %c0_5 = arith.constant 0 : index
    %7 = vector.load %arg4[%c0_4, %c0_5] : memref<1x512xf32, #tpu.memory_space<vmem>>, vector<1x256xf32>
    %8 = vector.broadcast %7 : vector<1x256xf32> to vector<128x256xf32>
    %9 = arith.addf %8, %6 : vector<128x256xf32>
    %10 = tpu.iota {dimensions = array<i32: 1>} : vector<1x256xi32>
    %c0_i32_6 = arith.constant 0 : i32
    %11 = vector.broadcast %c0_i32_6 : i32 to vector<1x256xi32>
    %12 = arith.addi %11, %10 : vector<1x256xi32>
    %cst_7 = arith.constant dense<0x7F800000> : vector<128xf32>
    %13 = vector.multi_reduction <minimumf>, %9, %cst_7 [1] : vector<128x256xf32> to vector<128xf32>
    %14 = vector.shape_cast %13 : vector<128xf32> to vector<128x1xf32>
    %15 = vector.broadcast %14 : vector<128x1xf32> to vector<128x256xf32>
    %16 = arith.cmpf oeq, %9, %15 : vector<128x256xf32>
    %c512_i32 = arith.constant 512 : i32
    %17 = vector.shape_cast %12 : vector<1x256xi32> to vector<1x256xi32>
    %18 = vector.broadcast %17 : vector<1x256xi32> to vector<128x256xi32>
    %19 = vector.broadcast %c512_i32 : i32 to vector<128x256xi32>
    %20 = arith.select %16, %18, %19 : vector<128x256xi1>, vector<128x256xi32>
    %cst_8 = arith.constant dense<2147483647> : vector<128xi32>
    %21 = vector.multi_reduction <minsi>, %20, %cst_8 [1] : vector<128x256xi32> to vector<128xi32>
    %22 = vector.shape_cast %21 : vector<128xi32> to vector<128x1xi32>
    %c0_9 = arith.constant 0 : index
    %c256 = arith.constant 256 : index
    %23 = vector.load %arg3[%c0_9, %c256] : memref<64x512xbf16, #tpu.memory_space<vmem>>, vector<64x256xbf16>
    %cst_10 = arith.constant dense<0.000000e+00> : vector<128x256xf32>
    %24 = tpu.matmul %4, %23, %cst_10 {dimension_numbers = #tpu.dot_dimension_numbers<[1], [0], [0], [1], [0, 0, 1, 1], [], []>} : vector<128x64xbf16>, vector<64x256xbf16>, vector<128x256xf32> -> vector<128x256xf32>
    %c0_11 = arith.constant 0 : index
    %c256_12 = arith.constant 256 : index
    %25 = vector.load %arg4[%c0_11, %c256_12] : memref<1x512xf32, #tpu.memory_space<vmem>>, vector<1x256xf32>
    %26 = vector.broadcast %25 : vector<1x256xf32> to vector<128x256xf32>
    %27 = arith.addf %26, %24 : vector<128x256xf32>
    %28 = tpu.iota {dimensions = array<i32: 1>} : vector<1x256xi32>
    %c256_i32 = arith.constant 256 : i32
    %29 = vector.broadcast %c256_i32 : i32 to vector<1x256xi32>
    %30 = arith.addi %29, %28 : vector<1x256xi32>
    %cst_13 = arith.constant dense<0x7F800000> : vector<128xf32>
    %31 = vector.multi_reduction <minimumf>, %27, %cst_13 [1] : vector<128x256xf32> to vector<128xf32>
    %32 = vector.shape_cast %31 : vector<128xf32> to vector<128x1xf32>
    %33 = vector.broadcast %32 : vector<128x1xf32> to vector<128x256xf32>
    %34 = arith.cmpf oeq, %27, %33 : vector<128x256xf32>
    %c512_i32_14 = arith.constant 512 : i32
    %35 = vector.shape_cast %30 : vector<1x256xi32> to vector<1x256xi32>
    %36 = vector.broadcast %35 : vector<1x256xi32> to vector<128x256xi32>
    %37 = vector.broadcast %c512_i32_14 : i32 to vector<128x256xi32>
    %38 = arith.select %34, %36, %37 : vector<128x256xi1>, vector<128x256xi32>
    %cst_15 = arith.constant dense<2147483647> : vector<128xi32>
    %39 = vector.multi_reduction <minsi>, %38, %cst_15 [1] : vector<128x256xi32> to vector<128xi32>
    %40 = vector.shape_cast %39 : vector<128xi32> to vector<128x1xi32>
    %41 = arith.cmpf olt, %32, %14 : vector<128x1xf32>
    %42 = arith.select %41, %40, %22 : vector<128x1xi1>, vector<128x1xi32>
    %c0_16 = arith.constant 0 : index
    %c0_17 = arith.constant 0 : index
    %43 = vector.load %arg5[%c0_16, %c0_17] : memref<128x1xi32, #tpu.memory_space<vmem>>, vector<128x1xi32>
    tpu.vector_store %arg5[%c0_16, %c0_17], %42 {strides = array<i32>} : memref<128x1xi32, #tpu.memory_space<vmem>>, vector<128x1xi32>,
    %44 = tpu.iota {dimensions = array<i32: 1>} : vector<1x256xi32>
    %c0_i32_18 = arith.constant 0 : i32
    %45 = vector.broadcast %c0_i32_18 : i32 to vector<1x256xi32>
    %46 = arith.addi %45, %44 : vector<1x256xi32>
    %47 = vector.broadcast %46 : vector<1x256xi32> to vector<128x256xi32>
    %48 = vector.broadcast %42 : vector<128x1xi32> to vector<128x256xi32>
    %49 = arith.cmpi eq, %47, %48 : vector<128x256xi32>
    %50 = arith.extui %49 : vector<128x256xi1> to vector<128x256xi32>
    %51 = arith.sitofp %50 : vector<128x256xi32> to vector<128x256xf32>
    %c0_19 = arith.constant 0 : index
    %c0_20 = arith.constant 0 : index
    %c0_21 = arith.constant 0 : index
    %52 = vector.load %arg7[%c0_19, %c0_20, %c0_21] : memref<1x1x512xf32, #tpu.memory_space<vmem>>, vector<1x1x256xf32>
    %53 = vector.shape_cast %52 : vector<1x1x256xf32> to vector<1x256xf32>
    %cst_22 = arith.constant dense<0.000000e+00> : vector<256xf32>
    %54 = vector.multi_reduction <add>, %51, %cst_22 [0] : vector<128x256xf32> to vector<256xf32>
    %55 = vector.shape_cast %54 : vector<256xf32> to vector<1x256xf32>
    %56 = arith.addf %53, %55 : vector<1x256xf32>
    %c0_23 = arith.constant 0 : index
    %c0_24 = arith.constant 0 : index
    %c0_25 = arith.constant 0 : index
    %57 = vector.load %arg7[%c0_23, %c0_24, %c0_25] : memref<1x1x512xf32, #tpu.memory_space<vmem>>, vector<1x1x256xf32>
    %58 = vector.shape_cast %57 : vector<1x1x256xf32> to vector<1x256xf32>
    %59 = vector.shape_cast %56 : vector<1x256xf32> to vector<1x1x256xf32>
    tpu.vector_store %arg7[%c0_23, %c0_24, %c0_25], %59 {strides = array<i32>} : memref<1x1x512xf32, #tpu.memory_space<vmem>>, vector<1x1x256xf32>,
    %60 = arith.truncf %51 : vector<128x256xf32> to vector<128x256xbf16>
    %cst_26 = arith.constant dense<0.000000e+00> : vector<256x64xf32>
    %61 = tpu.matmul %60, %4, %cst_26 {dimension_numbers = #tpu.dot_dimension_numbers<[0], [0], [1], [1], [0, 1, 1, 1], [], []>} : vector<128x256xbf16>, vector<128x64xbf16>, vector<256x64xf32> -> vector<256x64xf32>
    %c0_27 = arith.constant 0 : index
    %c0_28 = arith.constant 0 : index
    %c0_29 = arith.constant 0 : index
    %62 = vector.load %arg6[%c0_27, %c0_28, %c0_29] : memref<1x512x64xf32, #tpu.memory_space<vmem>>, vector<1x256x64xf32>
    %63 = vector.shape_cast %62 : vector<1x256x64xf32> to vector<256x64xf32>
    %64 = arith.addf %63, %61 : vector<256x64xf32>
    %c0_30 = arith.constant 0 : index
    %c0_31 = arith.constant 0 : index
    %c0_32 = arith.constant 0 : index
    %65 = vector.load %arg6[%c0_30, %c0_31, %c0_32] : memref<1x512x64xf32, #tpu.memory_space<vmem>>, vector<1x256x64xf32>
    %66 = vector.shape_cast %65 : vector<1x256x64xf32> to vector<256x64xf32>
    %67 = vector.shape_cast %64 : vector<256x64xf32> to vector<1x256x64xf32>
    tpu.vector_store %arg6[%c0_30, %c0_31, %c0_32], %67 {strides = array<i32>} : memref<1x512x64xf32, #tpu.memory_space<vmem>>, vector<1x256x64xf32>,
    %68 = tpu.iota {dimensions = array<i32: 1>} : vector<1x256xi32>
    %c256_i32_33 = arith.constant 256 : i32
    %69 = vector.broadcast %c256_i32_33 : i32 to vector<1x256xi32>
    %70 = arith.addi %69, %68 : vector<1x256xi32>
    %71 = vector.broadcast %70 : vector<1x256xi32> to vector<128x256xi32>
    %72 = vector.broadcast %42 : vector<128x1xi32> to vector<128x256xi32>
    %73 = arith.cmpi eq, %71, %72 : vector<128x256xi32>
    %74 = arith.extui %73 : vector<128x256xi1> to vector<128x256xi32>
    %75 = arith.sitofp %74 : vector<128x256xi32> to vector<128x256xf32>
    %c0_34 = arith.constant 0 : index
    %c0_35 = arith.constant 0 : index
    %c256_36 = arith.constant 256 : index
    %76 = vector.load %arg7[%c0_34, %c0_35, %c256_36] : memref<1x1x512xf32, #tpu.memory_space<vmem>>, vector<1x1x256xf32>
    %77 = vector.shape_cast %76 : vector<1x1x256xf32> to vector<1x256xf32>
    %cst_37 = arith.constant dense<0.000000e+00> : vector<256xf32>
    %78 = vector.multi_reduction <add>, %75, %cst_37 [0] : vector<128x256xf32> to vector<256xf32>
    %79 = vector.shape_cast %78 : vector<256xf32> to vector<1x256xf32>
    %80 = arith.addf %77, %79 : vector<1x256xf32>
    %c0_38 = arith.constant 0 : index
    %c0_39 = arith.constant 0 : index
    %c256_40 = arith.constant 256 : index
    %81 = vector.load %arg7[%c0_38, %c0_39, %c256_40] : memref<1x1x512xf32, #tpu.memory_space<vmem>>, vector<1x1x256xf32>
    %82 = vector.shape_cast %81 : vector<1x1x256xf32> to vector<1x256xf32>
    %83 = vector.shape_cast %80 : vector<1x256xf32> to vector<1x1x256xf32>
    tpu.vector_store %arg7[%c0_38, %c0_39, %c256_40], %83 {strides = array<i32>} : memref<1x1x512xf32, #tpu.memory_space<vmem>>, vector<1x1x256xf32>,
    %84 = arith.truncf %75 : vector<128x256xf32> to vector<128x256xbf16>
    %cst_41 = arith.constant dense<0.000000e+00> : vector<256x64xf32>
    %85 = tpu.matmul %84, %4, %cst_41 {dimension_numbers = #tpu.dot_dimension_numbers<[0], [0], [1], [1], [0, 1, 1, 1], [], []>} : vector<128x256xbf16>, vector<128x64xbf16>, vector<256x64xf32> -> vector<256x64xf32>
    %c0_42 = arith.constant 0 : index
    %c256_43 = arith.constant 256 : index
    %c0_44 = arith.constant 0 : index
    %86 = vector.load %arg6[%c0_42, %c256_43, %c0_44] : memref<1x512x64xf32, #tpu.memory_space<vmem>>, vector<1x256x64xf32>
    %87 = vector.shape_cast %86 : vector<1x256x64xf32> to vector<256x64xf32>
    %88 = arith.addf %87, %85 : vector<256x64xf32>
    %c0_45 = arith.constant 0 : index
    %c256_46 = arith.constant 256 : index
    %c0_47 = arith.constant 0 : index
    %89 = vector.load %arg6[%c0_45, %c256_46, %c0_47] : memref<1x512x64xf32, #tpu.memory_space<vmem>>, vector<1x256x64xf32>
    %90 = vector.shape_cast %89 : vector<1x256x64xf32> to vector<256x64xf32>
    %91 = vector.shape_cast %88 : vector<256x64xf32> to vector<1x256x64xf32>
    tpu.vector_store %arg6[%c0_45, %c256_46, %c0_47], %91 {strides = array<i32>} : memref<1x512x64xf32, #tpu.memory_space<vmem>>, vector<1x256x64xf32>,
    return
  }
  func.func @transform_0(%arg0: i32, %arg1: i32) -> (i32, i32) {
    %c1_i32 = arith.constant 1 : i32
    %0 = arith.muli %arg0, %c1_i32 : i32
    %1 = arith.addi %0, %arg1 : i32
    %c0_i32 = arith.constant 0 : i32
    %c0_i32_0 = arith.constant 0 : i32
    return %1, %c0_i32 : i32, i32
  }
  func.func @transform_1(%arg0: i32, %arg1: i32) -> (i32, i32) {
    %c0_i32 = arith.constant 0 : i32
    %c0_i32_0 = arith.constant 0 : i32
    %c0_i32_1 = arith.constant 0 : i32
    return %c0_i32, %c0_i32_0 : i32, i32
  }
  func.func @transform_2(%arg0: i32, %arg1: i32) -> (i32, i32) {
    %c0_i32 = arith.constant 0 : i32
    %c0_i32_0 = arith.constant 0 : i32
    %c0_i32_1 = arith.constant 0 : i32
    return %c0_i32, %c0_i32_0 : i32, i32
  }
  func.func @transform_3(%arg0: i32, %arg1: i32) -> (i32, i32) {
    %c1_i32 = arith.constant 1 : i32
    %0 = arith.muli %arg0, %c1_i32 : i32
    %1 = arith.addi %0, %arg1 : i32
    %c0_i32 = arith.constant 0 : i32
    %c0_i32_0 = arith.constant 0 : i32
    return %1, %c0_i32 : i32, i32
  }
  func.func @transform_4(%arg0: i32, %arg1: i32) -> (i32, i32, i32) {
    %c0_i32 = arith.constant 0 : i32
    %c0_i32_0 = arith.constant 0 : i32
    %c0_i32_1 = arith.constant 0 : i32
    return %arg0, %c0_i32, %c0_i32_0 : i32, i32, i32
  }
  func.func @transform_5(%arg0: i32, %arg1: i32) -> (i32, i32, i32) {
    %c0_i32 = arith.constant 0 : i32
    %c0_i32_0 = arith.constant 0 : i32
    %c0_i32_1 = arith.constant 0 : i32
    return %arg0, %c0_i32, %c0_i32_0 : i32, i32, i32
  }
}

</mosaic_0001>

<llo_original>
// kernel: tpu_custom_call.1
$region0: #{tpu_custom_call.1}
  #allocation0 [shape = 'u32[]', space=smem, size = 0x4, offset = 0x4, fixed_abs, tag = 'smem constant byte address 0x4 - core index']
  #allocation1 [shape = 'u32[72,128]{1,0:T(1,128)}', space=vmem, size = 0x9000, scoped, tag = 'internal scratch']
  %s0 = inlined_call_operand.vmem [shape: f32[128,64], index: 0, kind: input, shape index: {}]
  %s1 = inlined_call_operand.vmem [shape: bf16[64,512], index: 1, kind: input, shape index: {}]
  %s2 = inlined_call_operand.vmem [shape: f32[1,512], index: 2, kind: input, shape index: {}]
  %s3 = inlined_call_operand.vmem [shape: s32[128,1], index: 3, kind: output, shape index: {0}]
  %s4 = inlined_call_operand.vmem [shape: f32[1,512,64], index: 4, kind: output, shape index: {1}]
  %s5 = inlined_call_operand.hbm [shape: f32[1,1,512], index: 5, kind: output, shape index: {2}]
  %6 = xla_tuple %s3, %s4, %s5
  %s7 = sld [smem:[#allocation0]]
  $region42: #{tpu_custom_call.1} parent=0
    _
  %s9 = ssub.s32 1, %s7
  %s10 = scalar_select 0, %s9, %s7
  $region1: #{tpu_custom_call.1} parent=0
    #allocation2 [shape = 'u8[2048]{0}', space=vmem, size = 0x800, scoped, tag = 'output window, operand 2, single buffered']
    #allocation3 [shape = 's32[1]{0}', space=sflag, size = 0x4, scoped, tag = 'scoped memory for tpu_custom_call.1']
    %11 = vsyncpa [#allocation3], 0
    // Predicated region
    $region2: #{tpu_custom_call.1} parent=1 // pred_check
      _
    $region3: #{tpu_custom_call.1} parent=1 // pred_check_branch
      %13 = sbr.rel (0) target = $region5
    $region4: #{tpu_custom_call.1} parent=1 // pred_region
      %s14 = sadd.s32 0, 0
      %s15 = smul.u32 16, %s14
      %p16 = scmp.lt.s32.totalorder %s15, 15
      %s17 = scalar_select %p16, %s15, 15
      %s18 = smul.addr %s17, 8
      %s19 = scalar_lea.vmem %s0, %s18
      %s20 = sadd.s32 0, 0
      %s21 = smul.u32 16, %s20
    $region5: #{tpu_custom_call.1} parent=1 // pred_fallthru
      _
    // Predicated region
    $region6: #{tpu_custom_call.1} parent=1 // pred_check
      _
    $region7: #{tpu_custom_call.1} parent=1 // pred_check_branch
      %23 = sbr.rel (0) target = $region9
    $region8: #{tpu_custom_call.1} parent=1 // pred_region
      _
    $region9: #{tpu_custom_call.1} parent=1 // pred_fallthru
      _
    // Predicated region
    $region10: #{tpu_custom_call.1} parent=1 // pred_check
      _
    $region11: #{tpu_custom_call.1} parent=1 // pred_check_branch
      %25 = sbr.rel (0) target = $region13
    $region12: #{tpu_custom_call.1} parent=1 // pred_region
      _
    $region13: #{tpu_custom_call.1} parent=1 // pred_fallthru
      _
    %s26 = sadd.s32 0, 0
    %s27 = smul.u32 16, %s26
    %p28 = scmp.lt.s32.totalorder %s27, 15
    %s29 = scalar_select %p28, %s27, 15
    %s30 = smul.addr %s29, 8
    %s31 = scalar_lea.vmem %s0, %s30
    %s32 = sadd.s32 0, 0
    %s33 = smul.u32 16, %s32
    %p34 = scmp.lt.s32.totalorder %s33, 15
    %s35 = scalar_select %p34, %s33, 15
    %s36 = smul.addr %s35, 8
    %s37 = scalar_lea.vmem %s3, %s36
    %s38 = sadd.s32 0, 0
    %s39 = smul.u32 16, %s38
    %p40 = scmp.lt.s32.totalorder %s39, 15
    %s41 = scalar_select %p40, %s39, 15
    %s42 = smul.addr %s41, 8
    %s43 = scalar_lea.vmem %s0, %s42
    %s44 = sadd.s32 0, 0
    %s45 = smul.u32 16, %s44
    %s46 = sadd.s32 0, 0
    %s47 = smul.u32 16, %s46
    %p48 = scmp.lt.s32.totalorder %s47, 15
    %s49 = scalar_select %p48, %s47, 15
    %s50 = smul.addr %s49, 8
    %s51 = scalar_lea.vmem %s3, %s50
    %s52 = sadd.s32 0, 0
    %s53 = smul.u32 16, %s52
    %p55 = scmp.eq.s32.totalorder 0, 0
    // Predicated region
    $region14: #{tpu_custom_call.1} parent=1 // pred_check
      %p56 = pneg %p55
    $region15: #{tpu_custom_call.1} parent=1 // pred_check_branch
      %58 = sbr.rel (%p56) target = $region17
    $region16: #{tpu_custom_call.1} parent=1 // pred_region
      %vm59 = vcmask 523264
      %60 = vst.msk [vmem:[%s4] sm:$0xff] %vm59, 0.0
      %61 = vst.msk [vmem:[%s4 + $0x8] sm:$0xff] %vm59, 0.0
      %62 = vst.msk [vmem:[%s4 + $0x10] sm:$0xff] %vm59, 0.0
      %63 = vst.msk [vmem:[%s4 + $0x18] sm:$0xff] %vm59, 0.0
      %64 = vst.msk [vmem:[%s4 + $0x20] sm:$0xff] %vm59, 0.0
      %65 = vst.msk [vmem:[%s4 + $0x28] sm:$0xff] %vm59, 0.0
      %66 = vst.msk [vmem:[%s4 + $0x30] sm:$0xff] %vm59, 0.0
      %67 = vst.msk [vmem:[%s4 + $0x38] sm:$0xff] %vm59, 0.0
      %68 = vst.msk [vmem:[%s4 + $0x40] sm:$0xff] %vm59, 0.0
      %69 = vst.msk [vmem:[%s4 + $0x48] sm:$0xff] %vm59, 0.0
      %70 = vst.msk [vmem:[%s4 + $0x50] sm:$0xff] %vm59, 0.0
      %71 = vst.msk [vmem:[%s4 + $0x58] sm:$0xff] %vm59, 0.0
      %72 = vst.msk [vmem:[%s4 + $0x60] sm:$0xff] %vm59, 0.0
      %73 = vst.msk [vmem:[%s4 + $0x68] sm:$0xff] %vm59, 0.0
      %74 = vst.msk [vmem:[%s4 + $0x70] sm:$0xff] %vm59, 0.0
      %75 = vst.msk [vmem:[%s4 + $0x78] sm:$0xff] %vm59, 0.0
      %76 = vst.msk [vmem:[%s4 + $0x80] sm:$0xff] %vm59, 0.0
      %77 = vst.msk [vmem:[%s4 + $0x88] sm:$0xff] %vm59, 0.0
      %78 = vst.msk [vmem:[%s4 + $0x90] sm:$0xff] %vm59, 0.0
      %79 = vst.msk [vmem:[%s4 + $0x98] sm:$0xff] %vm59, 0.0
      %80 = vst.msk [vmem:[%s4 + $0xa0] sm:$0xff] %vm59, 0.0
      %81 = vst.msk [vmem:[%s4 + $0xa8] sm:$0xff] %vm59, 0.0
      %82 = vst.msk [vmem:[%s4 + $0xb0] sm:$0xff] %vm59, 0.0
      %83 = vst.msk [vmem:[%s4 + $0xb8] sm:$0xff] %vm59, 0.0
      %84 = vst.msk [vmem:[%s4 + $0xc0] sm:$0xff] %vm59, 0.0
      %85 = vst.msk [vmem:[%s4 + $0xc8] sm:$0xff] %vm59, 0.0
      %86 = vst.msk [vmem:[%s4 + $0xd0] sm:$0xff] %vm59, 0.0
      %87 = vst.msk [vmem:[%s4 + $0xd8] sm:$0xff] %vm59, 0.0
      %88 = vst.msk [vmem:[%s4 + $0xe0] sm:$0xff] %vm59, 0.0
      %89 = vst.msk [vmem:[%s4 + $0xe8] sm:$0xff] %vm59, 0.0
      %90 = vst.msk [vmem:[%s4 + $0xf0] sm:$0xff] %vm59, 0.0
      %91 = vst.msk [vmem:[%s4 + $0xf8] sm:$0xff] %vm59, 0.0
      %92 = vst.msk [vmem:[%s4 + $0x100] sm:$0xff] %vm59, 0.0
      %93 = vst.msk [vmem:[%s4 + $0x108] sm:$0xff] %vm59, 0.0
      %94 = vst.msk [vmem:[%s4 + $0x110] sm:$0xff] %vm59, 0.0
      %95 = vst.msk [vmem:[%s4 + $0x118] sm:$0xff] %vm59, 0.0
      %96 = vst.msk [vmem:[%s4 + $0x120] sm:$0xff] %vm59, 0.0
      %97 = vst.msk [vmem:[%s4 + $0x128] sm:$0xff] %vm59, 0.0
      %98 = vst.msk [vmem:[%s4 + $0x130] sm:$0xff] %vm59, 0.0
      %99 = vst.msk [vmem:[%s4 + $0x138] sm:$0xff] %vm59, 0.0
      %100 = vst.msk [vmem:[%s4 + $0x140] sm:$0xff] %vm59, 0.0
      %101 = vst.msk [vmem:[%s4 + $0x148] sm:$0xff] %vm59, 0.0
      %102 = vst.msk [vmem:[%s4 + $0x150] sm:$0xff] %vm59, 0.0
      %103 = vst.msk [vmem:[%s4 + $0x158] sm:$0xff] %vm59, 0.0
      %104 = vst.msk [vmem:[%s4 + $0x160] sm:$0xff] %vm59, 0.0
      %105 = vst.msk [vmem:[%s4 + $0x168] sm:$0xff] %vm59, 0.0
      %106 = vst.msk [vmem:[%s4 + $0x170] sm:$0xff] %vm59, 0.0
      %107 = vst.msk [vmem:[%s4 + $0x178] sm:$0xff] %vm59, 0.0
      %108 = vst.msk [vmem:[%s4 + $0x180] sm:$0xff] %vm59, 0.0
      %109 = vst.msk [vmem:[%s4 + $0x188] sm:$0xff] %vm59, 0.0
      %110 = vst.msk [vmem:[%s4 + $0x190] sm:$0xff] %vm59, 0.0
      %111 = vst.msk [vmem:[%s4 + $0x198] sm:$0xff] %vm59, 0.0
      %112 = vst.msk [vmem:[%s4 + $0x1a0] sm:$0xff] %vm59, 0.0
      %113 = vst.msk [vmem:[%s4 + $0x1a8] sm:$0xff] %vm59, 0.0
      %114 = vst.msk [vmem:[%s4 + $0x1b0] sm:$0xff] %vm59, 0.0
      %115 = vst.msk [vmem:[%s4 + $0x1b8] sm:$0xff] %vm59, 0.0
      %116 = vst.msk [vmem:[%s4 + $0x1c0] sm:$0xff] %vm59, 0.0
      %117 = vst.msk [vmem:[%s4 + $0x1c8] sm:$0xff] %vm59, 0.0
      %118 = vst.msk [vmem:[%s4 + $0x1d0] sm:$0xff] %vm59, 0.0
      %119 = vst.msk [vmem:[%s4 + $0x1d8] sm:$0xff] %vm59, 0.0
      %120 = vst.msk [vmem:[%s4 + $0x1e0] sm:$0xff] %vm59, 0.0
      %121 = vst.msk [vmem:[%s4 + $0x1e8] sm:$0xff] %vm59, 0.0
      %122 = vst.msk [vmem:[%s4 + $0x1f0] sm:$0xff] %vm59, 0.0
      %123 = vst.msk [vmem:[%s4 + $0x1f8] sm:$0xff] %vm59, 0.0
      %v124 = vlaneseq
      %vm125 = vcmp.ge.s32.totalorder %v124, 0
      %vm126 = vcmp.lt.s32.totalorder %v124, 512
      %vm127 = vmand %vm125, %vm126
      %128 = vst.msk [vmem:[#allocation2] sm:$0xf] %vm127, 0.0
    $region17: #{tpu_custom_call.1} parent=1 // pred_fallthru
      _
    %v129 = vld [vmem:[%s43] sm:$0xff]
    %v130 = vld [vmem:[%s43 + $0x8] sm:$0xff]
    %v131 = vld [vmem:[%s43 + $0x10] sm:$0xff]
    %v132 = vld [vmem:[%s43 + $0x18] sm:$0xff]
    %v133 = vld [vmem:[%s43 + $0x20] sm:$0xff]
    %v134 = vld [vmem:[%s43 + $0x28] sm:$0xff]
    %v135 = vld [vmem:[%s43 + $0x30] sm:$0xff]
    %v136 = vld [vmem:[%s43 + $0x38] sm:$0xff]
    %v137 = vld [vmem:[%s43 + $0x40] sm:$0xff]
    %v138 = vld [vmem:[%s43 + $0x48] sm:$0xff]
    %v139 = vld [vmem:[%s43 + $0x50] sm:$0xff]
    %v140 = vld [vmem:[%s43 + $0x58] sm:$0xff]
    %v141 = vld [vmem:[%s43 + $0x60] sm:$0xff]
    %v142 = vld [vmem:[%s43 + $0x68] sm:$0xff]
    %v143 = vld [vmem:[%s43 + $0x70] sm:$0xff]
    %v144 = vld [vmem:[%s43 + $0x78] sm:$0xff]
    %v145 = vpack.c.bf16 %v130, %v129
    %v146 = vpack.c.bf16 %v132, %v131
    %v147 = vpack.c.bf16 %v134, %v133
    %v148 = vpack.c.bf16 %v136, %v135
    %v149 = vpack.c.bf16 %v138, %v137
    %v150 = vpack.c.bf16 %v140, %v139
    %v151 = vpack.c.bf16 %v142, %v141
    %v152 = vpack.c.bf16 %v144, %v143
    %v153 = vld [vmem:[%s1] sm:$0xff]
    %v154 = vld [vmem:[%s1 + $0x10] sm:$0xff]
    %v155 = vld [vmem:[%s1 + $0x20] sm:$0xff]
    %v156 = vld [vmem:[%s1 + $0x30] sm:$0xff]
    %v157 = vld [vmem:[%s1 + $0x40] sm:$0xff]
    %v158 = vld [vmem:[%s1 + $0x50] sm:$0xff]
    %v159 = vld [vmem:[%s1 + $0x60] sm:$0xff]
    %v160 = vld [vmem:[%s1 + $0x70] sm:$0xff]
    %v169 = vunpack.c.l.b16 %v153
    %v170 = vunpack.c.h.b16 %v153
    %v171 = vunpack.c.l.b16 %v154
    %v172 = vunpack.c.h.b16 %v154
    %v173 = vunpack.c.l.b16 %v155
    %v174 = vunpack.c.h.b16 %v155
    %v175 = vunpack.c.l.b16 %v156
    %v176 = vunpack.c.h.b16 %v156
    %v177 = vunpack.c.l.b16 %v157
    %v178 = vunpack.c.h.b16 %v157
    %v179 = vunpack.c.l.b16 %v158
    %v180 = vunpack.c.h.b16 %v158
    %v181 = vunpack.c.l.b16 %v159
    %v182 = vunpack.c.h.b16 %v159
    %v183 = vunpack.c.l.b16 %v160
    %v184 = vunpack.c.h.b16 %v160
    %v185 = vpack.c.b16 %v171, %v169
    %v186 = vpack.c.b16 %v172, %v170
    %v187 = vpack.c.b16 %v175, %v173
    %v188 = vpack.c.b16 %v176, %v174
    %v189 = vpack.c.b16 %v179, %v177
    %v190 = vpack.c.b16 %v180, %v178
    %v191 = vpack.c.b16 %v183, %v181
    %v192 = vpack.c.b16 %v184, %v182
    %vm201 = vcmask 523264
    %v203 = vsel %vm201, %v145, 0
    %v206 = vsel %vm201, %v146, 0
    %v209 = vsel %vm201, %v147, 0
    %v212 = vsel %vm201, %v148, 0
    %v215 = vsel %vm201, %v149, 0
    %v218 = vsel %vm201, %v150, 0
    %v221 = vsel %vm201, %v151, 0
    %v224 = vsel %vm201, %v152, 0
    %226 = vmatpush.bf16.msra.mxu0 0
    %227 = vmatpush.bf16.msra.mxu0 0
    %228 = vmatpush.bf16.msra.mxu0 0
    %229 = vmatpush.bf16.msra.mxu0 0
    %230 = vmatpush.bf16.msra.mxu0 %v191
    %231 = vmatpush.bf16.msra.mxu0 %v189
    %232 = vmatpush.bf16.msra.mxu0 %v187
    %233 = vmatpush.bf16.msra.mxu0 %v185
    %234 = vmatmul.bf16.gmra.mxu0 %v203
    %v235 = vpop.f32.mrf.mxu0
    %v236 = vadd.f32 0.0, %v235
    %v237 = vpop.f32.mrf.mxu0
    %v238 = vadd.f32 0.0, %v237
    %239 = vmatmul.bf16.gmra.mxu0 %v206
    %v240 = vpop.f32.mrf.mxu0
    %v241 = vadd.f32 0.0, %v240
    %v242 = vpop.f32.mrf.mxu0
    %v243 = vadd.f32 0.0, %v242
    %244 = vmatmul.bf16.gmra.mxu0 %v209
    %v245 = vpop.f32.mrf.mxu0
    %v246 = vadd.f32 0.0, %v245
    %v247 = vpop.f32.mrf.mxu0
    %v248 = vadd.f32 0.0, %v247
    %249 = vmatmul.bf16.gmra.mxu0 %v212
    %v250 = vpop.f32.mrf.mxu0
    %v251 = vadd.f32 0.0, %v250
    %v252 = vpop.f32.mrf.mxu0
    %v253 = vadd.f32 0.0, %v252
    %254 = vmatmul.bf16.gmra.mxu0 %v215
    %v255 = vpop.f32.mrf.mxu0
    %v256 = vadd.f32 0.0, %v255
    %v257 = vpop.f32.mrf.mxu0
    %v258 = vadd.f32 0.0, %v257
    %259 = vmatmul.bf16.gmra.mxu0 %v218
    %v260 = vpop.f32.mrf.mxu0
    %v261 = vadd.f32 0.0, %v260
    %v262 = vpop.f32.mrf.mxu0
    %v263 = vadd.f32 0.0, %v262
    %264 = vmatmul.bf16.gmra.mxu0 %v221
    %v265 = vpop.f32.mrf.mxu0
    %v266 = vadd.f32 0.0, %v265
    %v267 = vpop.f32.mrf.mxu0
    %v268 = vadd.f32 0.0, %v267
    %269 = vmatmul.bf16.gmra.mxu0 %v224
    %v270 = vpop.f32.mrf.mxu0
    %v271 = vadd.f32 0.0, %v270
    %v272 = vpop.f32.mrf.mxu0
    %v273 = vadd.f32 0.0, %v272
    %274 = vdwg.mxu0
    %275 = vmatpush.bf16.msra.mxu0 0
    %276 = vmatpush.bf16.msra.mxu0 0
    %277 = vmatpush.bf16.msra.mxu0 0
    %278 = vmatpush.bf16.msra.mxu0 0
    %279 = vmatpush.bf16.msra.mxu0 %v192
    %280 = vmatpush.bf16.msra.mxu0 %v190
    %281 = vmatpush.bf16.msra.mxu0 %v188
    %282 = vmatpush.bf16.msra.mxu0 %v186
    %283 = vmatmul.bf16.gmra.mxu0 %v203
    %v284 = vpop.f32.mrf.mxu0
    %v285 = vadd.f32 0.0, %v284
    %v286 = vpop.f32.mrf.mxu0
    %v287 = vadd.f32 0.0, %v286
    %288 = vmatmul.bf16.gmra.mxu0 %v206
    %v289 = vpop.f32.mrf.mxu0
    %v290 = vadd.f32 0.0, %v289
    %v291 = vpop.f32.mrf.mxu0
    %v292 = vadd.f32 0.0, %v291
    %293 = vmatmul.bf16.gmra.mxu0 %v209
    %v294 = vpop.f32.mrf.mxu0
    %v295 = vadd.f32 0.0, %v294
    %v296 = vpop.f32.mrf.mxu0
    %v297 = vadd.f32 0.0, %v296
    %298 = vmatmul.bf16.gmra.mxu0 %v212
    %v299 = vpop.f32.mrf.mxu0
    %v300 = vadd.f32 0.0, %v299
    %v301 = vpop.f32.mrf.mxu0
    %v302 = vadd.f32 0.0, %v301
    %303 = vmatmul.bf16.gmra.mxu0 %v215
    %v304 = vpop.f32.mrf.mxu0
    %v305 = vadd.f32 0.0, %v304
    %v306 = vpop.f32.mrf.mxu0
    %v307 = vadd.f32 0.0, %v306
    %308 = vmatmul.bf16.gmra.mxu0 %v218
    %v309 = vpop.f32.mrf.mxu0
    %v310 = vadd.f32 0.0, %v309
    %v311 = vpop.f32.mrf.mxu0
    %v312 = vadd.f32 0.0, %v311
    %313 = vmatmul.bf16.gmra.mxu0 %v221
    %v314 = vpop.f32.mrf.mxu0
    %v315 = vadd.f32 0.0, %v314
    %v316 = vpop.f32.mrf.mxu0
    %v317 = vadd.f32 0.0, %v316
    %318 = vmatmul.bf16.gmra.mxu0 %v224
    %v319 = vpop.f32.mrf.mxu0
    %v320 = vadd.f32 0.0, %v319
    %v321 = vpop.f32.mrf.mxu0
    %v322 = vadd.f32 0.0, %v321
    %323 = vdwg.mxu0
    %v324 = vld [vmem:[%s2] sm:$0x3]
    %v326 = vperm.slane %v324, 0
    %v327 = vperm.slane %v324, 1
    %v330 = vadd.f32 %v326, %v236
    %v331 = vadd.f32 %v327, %v285
    %v332 = vadd.f32 %v326, %v238
    %v333 = vadd.f32 %v327, %v287
    %v334 = vadd.f32 %v326, %v241
    %v335 = vadd.f32 %v327, %v290
    %v336 = vadd.f32 %v326, %v243
    %v337 = vadd.f32 %v327, %v292
    %v338 = vadd.f32 %v326, %v246
    %v339 = vadd.f32 %v327, %v295
    %v340 = vadd.f32 %v326, %v248
    %v341 = vadd.f32 %v327, %v297
    %v342 = vadd.f32 %v326, %v251
    %v343 = vadd.f32 %v327, %v300
    %v344 = vadd.f32 %v326, %v253
    %v345 = vadd.f32 %v327, %v302
    %v346 = vadd.f32 %v326, %v256
    %v347 = vadd.f32 %v327, %v305
    %v348 = vadd.f32 %v326, %v258
    %v349 = vadd.f32 %v327, %v307
    %v350 = vadd.f32 %v326, %v261
    %v351 = vadd.f32 %v327, %v310
    %v352 = vadd.f32 %v326, %v263
    %v353 = vadd.f32 %v327, %v312
    %v354 = vadd.f32 %v326, %v266
    %v355 = vadd.f32 %v327, %v315
    %v356 = vadd.f32 %v326, %v268
    %v357 = vadd.f32 %v327, %v317
    %v358 = vadd.f32 %v326, %v271
    %v359 = vadd.f32 %v327, %v320
    %v360 = vadd.f32 %v326, %v273
    %v361 = vadd.f32 %v327, %v322
    %v362 = vlaneseq
    %v363 = vand.u32 %v362, 127
    %v364 = vadd.s32 %v363, 128
    %v365 = vmin.f32 %v330, %v331
    %366 = vmin.xlane.f32.xlu0 %v365
    %v367 = vpop.xlane.xlu0 %366
    %v368 = vmin.f32 %v332, %v333
    %369 = vmin.xlane.f32.xlu0 %v368
    %v370 = vpop.xlane.xlu0 %369
    %v371 = vmin.f32 %v334, %v335
    %372 = vmin.xlane.f32.xlu0 %v371
    %v373 = vpop.xlane.xlu0 %372
    %v374 = vmin.f32 %v336, %v337
    %375 = vmin.xlane.f32.xlu0 %v374
    %v376 = vpop.xlane.xlu0 %375
    %v377 = vmin.f32 %v338, %v339
    %378 = vmin.xlane.f32.xlu0 %v377
    %v379 = vpop.xlane.xlu0 %378
    %v380 = vmin.f32 %v340, %v341
    %381 = vmin.xlane.f32.xlu0 %v380
    %v382 = vpop.xlane.xlu0 %381
    %v383 = vmin.f32 %v342, %v343
    %384 = vmin.xlane.f32.xlu0 %v383
    %v385 = vpop.xlane.xlu0 %384
    %v386 = vmin.f32 %v344, %v345
    %387 = vmin.xlane.f32.xlu0 %v386
    %v388 = vpop.xlane.xlu0 %387
    %v389 = vmin.f32 %v346, %v347
    %390 = vmin.xlane.f32.xlu0 %v389
    %v391 = vpop.xlane.xlu0 %390
    %v392 = vmin.f32 %v348, %v349
    %393 = vmin.xlane.f32.xlu0 %v392
    %v394 = vpop.xlane.xlu0 %393
    %v395 = vmin.f32 %v350, %v351
    %396 = vmin.xlane.f32.xlu0 %v395
    %v397 = vpop.xlane.xlu0 %396
    %v398 = vmin.f32 %v352, %v353
    %399 = vmin.xlane.f32.xlu0 %v398
    %v400 = vpop.xlane.xlu0 %399
    %v401 = vmin.f32 %v354, %v355
    %402 = vmin.xlane.f32.xlu0 %v401
    %v403 = vpop.xlane.xlu0 %402
    %v404 = vmin.f32 %v356, %v357
    %405 = vmin.xlane.f32.xlu0 %v404
    %v406 = vpop.xlane.xlu0 %405
    %v407 = vmin.f32 %v358, %v359
    %408 = vmin.xlane.f32.xlu0 %v407
    %v409 = vpop.xlane.xlu0 %408
    %v410 = vmin.f32 %v360, %v361
    %411 = vmin.xlane.f32.xlu0 %v410
    %v412 = vpop.xlane.xlu0 %411
    %vm413 = vcmp.eq.f32.partialorder %v330, %v367
    %vm414 = vcmp.eq.f32.partialorder %v331, %v367
    %vm415 = vcmp.eq.f32.partialorder %v332, %v370
    %vm416 = vcmp.eq.f32.partialorder %v333, %v370
    %vm417 = vcmp.eq.f32.partialorder %v334, %v373
    %vm418 = vcmp.eq.f32.partialorder %v335, %v373
    %vm419 = vcmp.eq.f32.partialorder %v336, %v376
    %vm420 = vcmp.eq.f32.partialorder %v337, %v376
    %vm421 = vcmp.eq.f32.partialorder %v338, %v379
    %vm422 = vcmp.eq.f32.partialorder %v339, %v379
    %vm423 = vcmp.eq.f32.partialorder %v340, %v382
    %vm424 = vcmp.eq.f32.partialorder %v341, %v382
    %vm425 = vcmp.eq.f32.partialorder %v342, %v385
    %vm426 = vcmp.eq.f32.partialorder %v343, %v385
    %vm427 = vcmp.eq.f32.partialorder %v344, %v388
    %vm428 = vcmp.eq.f32.partialorder %v345, %v388
    %vm429 = vcmp.eq.f32.partialorder %v346, %v391
    %vm430 = vcmp.eq.f32.partialorder %v347, %v391
    %vm431 = vcmp.eq.f32.partialorder %v348, %v394
    %vm432 = vcmp.eq.f32.partialorder %v349, %v394
    %vm433 = vcmp.eq.f32.partialorder %v350, %v397
    %vm434 = vcmp.eq.f32.partialorder %v351, %v397
    %vm435 = vcmp.eq.f32.partialorder %v352, %v400
    %vm436 = vcmp.eq.f32.partialorder %v353, %v400
    %vm437 = vcmp.eq.f32.partialorder %v354, %v403
    %vm438 = vcmp.eq.f32.partialorder %v355, %v403
    %vm439 = vcmp.eq.f32.partialorder %v356, %v406
    %vm440 = vcmp.eq.f32.partialorder %v357, %v406
    %vm441 = vcmp.eq.f32.partialorder %v358, %v409
    %vm442 = vcmp.eq.f32.partialorder %v359, %v409
    %vm443 = vcmp.eq.f32.partialorder %v360, %v412
    %vm444 = vcmp.eq.f32.partialorder %v361, %v412
    %v445 = vsel %vm413, %v363, 512
    %v446 = vsel %vm414, %v364, 512
    %v447 = vsel %vm415, %v363, 512
    %v448 = vsel %vm416, %v364, 512
    %v449 = vsel %vm417, %v363, 512
    %v450 = vsel %vm418, %v364, 512
    %v451 = vsel %vm419, %v363, 512
    %v452 = vsel %vm420, %v364, 512
    %v453 = vsel %vm421, %v363, 512
    %v454 = vsel %vm422, %v364, 512
    %v455 = vsel %vm423, %v363, 512
    %v456 = vsel %vm424, %v364, 512
    %v457 = vsel %vm425, %v363, 512
    %v458 = vsel %vm426, %v364, 512
    %v459 = vsel %vm427, %v363, 512
    %v460 = vsel %vm428, %v364, 512
    %v461 = vsel %vm429, %v363, 512
    %v462 = vsel %vm430, %v364, 512
    %v463 = vsel %vm431, %v363, 512
    %v464 = vsel %vm432, %v364, 512
    %v465 = vsel %vm433, %v363, 512
    %v466 = vsel %vm434, %v364, 512
    %v467 = vsel %vm435, %v363, 512
    %v468 = vsel %vm436, %v364, 512
    %v469 = vsel %vm437, %v363, 512
    %v470 = vsel %vm438, %v364, 512
    %v471 = vsel %vm439, %v363, 512
    %v472 = vsel %vm440, %v364, 512
    %v473 = vsel %vm441, %v363, 512
    %v474 = vsel %vm442, %v364, 512
    %v475 = vsel %vm443, %v363, 512
    %v476 = vsel %vm444, %v364, 512
    %vm477 = vcmp.lt.s32.totalorder %v445, %v446
    %v478 = vsel %vm477, %v445, %v446
    %v479 = vand.u32 %v478, 65535
    %v480 = vshra.s32 %v478, 16
    %v481 = vcvt.s32.f32 %v479
    %v482 = vcvt.s32.f32 %v480
    %483 = vmin.xlane.f32.xlu0 %v482
    %v484 = vpop.xlane.xlu0 %483
    %vm485 = vcmp.eq.f32.partialorder %v482, %v484
    %v486 = vsel %vm485, %v481, inf
    %487 = vmin.xlane.f32.xlu0 %v486
    %v488 = vpop.xlane.xlu0 %487
    %v489 = vcvt.f32.s32 %v488
    %v490 = vcvt.f32.s32 %v484
    %v491 = vshll.u32 %v490, 16
    %v492 = vadd.s32 %v491, %v489
    %vm493 = vcmp.lt.s32.totalorder %v447, %v448
    %v494 = vsel %vm493, %v447, %v448
    %v495 = vand.u32 %v494, 65535
    %v496 = vshra.s32 %v494, 16
    %v497 = vcvt.s32.f32 %v495
    %v498 = vcvt.s32.f32 %v496
    %499 = vmin.xlane.f32.xlu0 %v498
    %v500 = vpop.xlane.xlu0 %499
    %vm501 = vcmp.eq.f32.partialorder %v498, %v500
    %v502 = vsel %vm501, %v497, inf
    %503 = vmin.xlane.f32.xlu0 %v502
    %v504 = vpop.xlane.xlu0 %503
    %v505 = vcvt.f32.s32 %v504
    %v506 = vcvt.f32.s32 %v500
    %v507 = vshll.u32 %v506, 16
    %v508 = vadd.s32 %v507, %v505
    %vm509 = vcmp.lt.s32.totalorder %v449, %v450
    %v510 = vsel %vm509, %v449, %v450
    %v511 = vand.u32 %v510, 65535
    %v512 = vshra.s32 %v510, 16
    %v513 = vcvt.s32.f32 %v511
    %v514 = vcvt.s32.f32 %v512
    %515 = vmin.xlane.f32.xlu0 %v514
    %v516 = vpop.xlane.xlu0 %515
    %vm517 = vcmp.eq.f32.partialorder %v514, %v516
    %v518 = vsel %vm517, %v513, inf
    %519 = vmin.xlane.f32.xlu0 %v518
    %v520 = vpop.xlane.xlu0 %519
    %v521 = vcvt.f32.s32 %v520
    %v522 = vcvt.f32.s32 %v516
    %v523 = vshll.u32 %v522, 16
    %v524 = vadd.s32 %v523, %v521
    %vm525 = vcmp.lt.s32.totalorder %v451, %v452
    %v526 = vsel %vm525, %v451, %v452
    %v527 = vand.u32 %v526, 65535
    %v528 = vshra.s32 %v526, 16
    %v529 = vcvt.s32.f32 %v527
    %v530 = vcvt.s32.f32 %v528
    %531 = vmin.xlane.f32.xlu0 %v530
    %v532 = vpop.xlane.xlu0 %531
    %vm533 = vcmp.eq.f32.partialorder %v530, %v532
    %v534 = vsel %vm533, %v529, inf
    %535 = vmin.xlane.f32.xlu0 %v534
    %v536 = vpop.xlane.xlu0 %535
    %v537 = vcvt.f32.s32 %v536
    %v538 = vcvt.f32.s32 %v532
    %v539 = vshll.u32 %v538, 16
    %v540 = vadd.s32 %v539, %v537
    %vm541 = vcmp.lt.s32.totalorder %v453, %v454
    %v542 = vsel %vm541, %v453, %v454
    %v543 = vand.u32 %v542, 65535
    %v544 = vshra.s32 %v542, 16
    %v545 = vcvt.s32.f32 %v543
    %v546 = vcvt.s32.f32 %v544
    %547 = vmin.xlane.f32.xlu0 %v546
    %v548 = vpop.xlane.xlu0 %547
    %vm549 = vcmp.eq.f32.partialorder %v546, %v548
    %v550 = vsel %vm549, %v545, inf
    %551 = vmin.xlane.f32.xlu0 %v550
    %v552 = vpop.xlane.xlu0 %551
    %v553 = vcvt.f32.s32 %v552
    %v554 = vcvt.f32.s32 %v548
    %v555 = vshll.u32 %v554, 16
    %v556 = vadd.s32 %v555, %v553
    %vm557 = vcmp.lt.s32.totalorder %v455, %v456
    %v558 = vsel %vm557, %v455, %v456
    %v559 = vand.u32 %v558, 65535
    %v560 = vshra.s32 %v558, 16
    %v561 = vcvt.s32.f32 %v559
    %v562 = vcvt.s32.f32 %v560
    %563 = vmin.xlane.f32.xlu0 %v562
    %v564 = vpop.xlane.xlu0 %563
    %vm565 = vcmp.eq.f32.partialorder %v562, %v564
    %v566 = vsel %vm565, %v561, inf
    %567 = vmin.xlane.f32.xlu0 %v566
    %v568 = vpop.xlane.xlu0 %567
    %v569 = vcvt.f32.s32 %v568
    %v570 = vcvt.f32.s32 %v564
    %v571 = vshll.u32 %v570, 16
    %v572 = vadd.s32 %v571, %v569
    %vm573 = vcmp.lt.s32.totalorder %v457, %v458
    %v574 = vsel %vm573, %v457, %v458
    %v575 = vand.u32 %v574, 65535
    %v576 = vshra.s32 %v574, 16
    %v577 = vcvt.s32.f32 %v575
    %v578 = vcvt.s32.f32 %v576
    %579 = vmin.xlane.f32.xlu0 %v578
    %v580 = vpop.xlane.xlu0 %579
    %vm581 = vcmp.eq.f32.partialorder %v578, %v580
    %v582 = vsel %vm581, %v577, inf
    %583 = vmin.xlane.f32.xlu0 %v582
    %v584 = vpop.xlane.xlu0 %583
    %v585 = vcvt.f32.s32 %v584
    %v586 = vcvt.f32.s32 %v580
    %v587 = vshll.u32 %v586, 16
    %v588 = vadd.s32 %v587, %v585
    %vm589 = vcmp.lt.s32.totalorder %v459, %v460
    %v590 = vsel %vm589, %v459, %v460
    %v591 = vand.u32 %v590, 65535
    %v592 = vshra.s32 %v590, 16
    %v593 = vcvt.s32.f32 %v591
    %v594 = vcvt.s32.f32 %v592
    %595 = vmin.xlane.f32.xlu0 %v594
    %v596 = vpop.xlane.xlu0 %595
    %vm597 = vcmp.eq.f32.partialorder %v594, %v596
    %v598 = vsel %vm597, %v593, inf
    %599 = vmin.xlane.f32.xlu0 %v598
    %v600 = vpop.xlane.xlu0 %599
    %v601 = vcvt.f32.s32 %v600
    %v602 = vcvt.f32.s32 %v596
    %v603 = vshll.u32 %v602, 16
    %v604 = vadd.s32 %v603, %v601
    %vm605 = vcmp.lt.s32.totalorder %v461, %v462
    %v606 = vsel %vm605, %v461, %v462
    %v607 = vand.u32 %v606, 65535
    %v608 = vshra.s32 %v606, 16
    %v609 = vcvt.s32.f32 %v607
    %v610 = vcvt.s32.f32 %v608
    %611 = vmin.xlane.f32.xlu0 %v610
    %v612 = vpop.xlane.xlu0 %611
    %vm613 = vcmp.eq.f32.partialorder %v610, %v612
    %v614 = vsel %vm613, %v609, inf
    %615 = vmin.xlane.f32.xlu0 %v614
    %v616 = vpop.xlane.xlu0 %615
    %v617 = vcvt.f32.s32 %v616
    %v618 = vcvt.f32.s32 %v612
    %v619 = vshll.u32 %v618, 16
    %v620 = vadd.s32 %v619, %v617
    %vm621 = vcmp.lt.s32.totalorder %v463, %v464
    %v622 = vsel %vm621, %v463, %v464
    %v623 = vand.u32 %v622, 65535
    %v624 = vshra.s32 %v622, 16
    %v625 = vcvt.s32.f32 %v623
    %v626 = vcvt.s32.f32 %v624
    %627 = vmin.xlane.f32.xlu0 %v626
    %v628 = vpop.xlane.xlu0 %627
    %vm629 = vcmp.eq.f32.partialorder %v626, %v628
    %v630 = vsel %vm629, %v625, inf
    %631 = vmin.xlane.f32.xlu0 %v630
    %v632 = vpop.xlane.xlu0 %631
    %v633 = vcvt.f32.s32 %v632
    %v634 = vcvt.f32.s32 %v628
    %v635 = vshll.u32 %v634, 16
    %v636 = vadd.s32 %v635, %v633
    %vm637 = vcmp.lt.s32.totalorder %v465, %v466
    %v638 = vsel %vm637, %v465, %v466
    %v639 = vand.u32 %v638, 65535
    %v640 = vshra.s32 %v638, 16
    %v641 = vcvt.s32.f32 %v639
    %v642 = vcvt.s32.f32 %v640
    %643 = vmin.xlane.f32.xlu0 %v642
    %v644 = vpop.xlane.xlu0 %643
    %vm645 = vcmp.eq.f32.partialorder %v642, %v644
    %v646 = vsel %vm645, %v641, inf
    %647 = vmin.xlane.f32.xlu0 %v646
    %v648 = vpop.xlane.xlu0 %647
    %v649 = vcvt.f32.s32 %v648
    %v650 = vcvt.f32.s32 %v644
    %v651 = vshll.u32 %v650, 16
    %v652 = vadd.s32 %v651, %v649
    %vm653 = vcmp.lt.s32.totalorder %v467, %v468
    %v654 = vsel %vm653, %v467, %v468
    %v655 = vand.u32 %v654, 65535
    %v656 = vshra.s32 %v654, 16
    %v657 = vcvt.s32.f32 %v655
    %v658 = vcvt.s32.f32 %v656
    %659 = vmin.xlane.f32.xlu0 %v658
    %v660 = vpop.xlane.xlu0 %659
    %vm661 = vcmp.eq.f32.partialorder %v658, %v660
    %v662 = vsel %vm661, %v657, inf
    %663 = vmin.xlane.f32.xlu0 %v662
    %v664 = vpop.xlane.xlu0 %663
    %v665 = vcvt.f32.s32 %v664
    %v666 = vcvt.f32.s32 %v660
    %v667 = vshll.u32 %v666, 16
    %v668 = vadd.s32 %v667, %v665
    %vm669 = vcmp.lt.s32.totalorder %v469, %v470
    %v670 = vsel %vm669, %v469, %v470
    %v671 = vand.u32 %v670, 65535
    %v672 = vshra.s32 %v670, 16
    %v673 = vcvt.s32.f32 %v671
    %v674 = vcvt.s32.f32 %v672
    %675 = vmin.xlane.f32.xlu0 %v674
    %v676 = vpop.xlane.xlu0 %675
    %vm677 = vcmp.eq.f32.partialorder %v674, %v676
    %v678 = vsel %vm677, %v673, inf
    %679 = vmin.xlane.f32.xlu0 %v678
    %v680 = vpop.xlane.xlu0 %679
    %v681 = vcvt.f32.s32 %v680
    %v682 = vcvt.f32.s32 %v676
    %v683 = vshll.u32 %v682, 16
    %v684 = vadd.s32 %v683, %v681
    %vm685 = vcmp.lt.s32.totalorder %v471, %v472
    %v686 = vsel %vm685, %v471, %v472
    %v687 = vand.u32 %v686, 65535
    %v688 = vshra.s32 %v686, 16
    %v689 = vcvt.s32.f32 %v687
    %v690 = vcvt.s32.f32 %v688
    %691 = vmin.xlane.f32.xlu0 %v690
    %v692 = vpop.xlane.xlu0 %691
    %vm693 = vcmp.eq.f32.partialorder %v690, %v692
    %v694 = vsel %vm693, %v689, inf
    %695 = vmin.xlane.f32.xlu0 %v694
    %v696 = vpop.xlane.xlu0 %695
    %v697 = vcvt.f32.s32 %v696
    %v698 = vcvt.f32.s32 %v692
    %v699 = vshll.u32 %v698, 16
    %v700 = vadd.s32 %v699, %v697
    %vm701 = vcmp.lt.s32.totalorder %v473, %v474
    %v702 = vsel %vm701, %v473, %v474
    %v703 = vand.u32 %v702, 65535
    %v704 = vshra.s32 %v702, 16
    %v705 = vcvt.s32.f32 %v703
    %v706 = vcvt.s32.f32 %v704
    %707 = vmin.xlane.f32.xlu0 %v706
    %v708 = vpop.xlane.xlu0 %707
    %vm709 = vcmp.eq.f32.partialorder %v706, %v708
    %v710 = vsel %vm709, %v705, inf
    %711 = vmin.xlane.f32.xlu0 %v710
    %v712 = vpop.xlane.xlu0 %711
    %v713 = vcvt.f32.s32 %v712
    %v714 = vcvt.f32.s32 %v708
    %v715 = vshll.u32 %v714, 16
    %v716 = vadd.s32 %v715, %v713
    %vm717 = vcmp.lt.s32.totalorder %v475, %v476
    %v718 = vsel %vm717, %v475, %v476
    %v719 = vand.u32 %v718, 65535
    %v720 = vshra.s32 %v718, 16
    %v721 = vcvt.s32.f32 %v719
    %v722 = vcvt.s32.f32 %v720
    %723 = vmin.xlane.f32.xlu0 %v722
    %v724 = vpop.xlane.xlu0 %723
    %vm725 = vcmp.eq.f32.partialorder %v722, %v724
    %v726 = vsel %vm725, %v721, inf
    %727 = vmin.xlane.f32.xlu0 %v726
    %v728 = vpop.xlane.xlu0 %727
    %v729 = vcvt.f32.s32 %v728
    %v730 = vcvt.f32.s32 %v724
    %v731 = vshll.u32 %v730, 16
    %v732 = vadd.s32 %v731, %v729
    %v733 = vld [vmem:[%s1 + $0x8] sm:$0xff]
    %v734 = vld [vmem:[%s1 + $0x18] sm:$0xff]
    %v735 = vld [vmem:[%s1 + $0x28] sm:$0xff]
    %v736 = vld [vmem:[%s1 + $0x38] sm:$0xff]
    %v737 = vld [vmem:[%s1 + $0x48] sm:$0xff]
    %v738 = vld [vmem:[%s1 + $0x58] sm:$0xff]
    %v739 = vld [vmem:[%s1 + $0x68] sm:$0xff]
    %v740 = vld [vmem:[%s1 + $0x78] sm:$0xff]
    %v749 = vunpack.c.l.b16 %v733
    %v750 = vunpack.c.h.b16 %v733
    %v751 = vunpack.c.l.b16 %v734
    %v752 = vunpack.c.h.b16 %v734
    %v753 = vunpack.c.l.b16 %v735
    %v754 = vunpack.c.h.b16 %v735
    %v755 = vunpack.c.l.b16 %v736
    %v756 = vunpack.c.h.b16 %v736
    %v757 = vunpack.c.l.b16 %v737
    %v758 = vunpack.c.h.b16 %v737
    %v759 = vunpack.c.l.b16 %v738
    %v760 = vunpack.c.h.b16 %v738
    %v761 = vunpack.c.l.b16 %v739
    %v762 = vunpack.c.h.b16 %v739
    %v763 = vunpack.c.l.b16 %v740
    %v764 = vunpack.c.h.b16 %v740
    %v765 = vpack.c.b16 %v751, %v749
    %v766 = vpack.c.b16 %v752, %v750
    %v767 = vpack.c.b16 %v755, %v753
    %v768 = vpack.c.b16 %v756, %v754
    %v769 = vpack.c.b16 %v759, %v757
    %v770 = vpack.c.b16 %v760, %v758
    %v771 = vpack.c.b16 %v763, %v761
    %v772 = vpack.c.b16 %v764, %v762
    %781 = vmatpush.bf16.msra.mxu0 0
    %782 = vmatpush.bf16.msra.mxu0 0
    %783 = vmatpush.bf16.msra.mxu0 0
    %784 = vmatpush.bf16.msra.mxu0 0
    %785 = vmatpush.bf16.msra.mxu0 %v771
    %786 = vmatpush.bf16.msra.mxu0 %v769
    %787 = vmatpush.bf16.msra.mxu0 %v767
    %788 = vmatpush.bf16.msra.mxu0 %v765
    %789 = vmatmul.bf16.gmra.mxu0 %v203
    %v790 = vpop.f32.mrf.mxu0
    %v791 = vadd.f32 0.0, %v790
    %v792 = vpop.f32.mrf.mxu0
    %v793 = vadd.f32 0.0, %v792
    %794 = vmatmul.bf16.gmra.mxu0 %v206
    %v795 = vpop.f32.mrf.mxu0
    %v796 = vadd.f32 0.0, %v795
    %v797 = vpop.f32.mrf.mxu0
    %v798 = vadd.f32 0.0, %v797
    %799 = vmatmul.bf16.gmra.mxu0 %v209
    %v800 = vpop.f32.mrf.mxu0
    %v801 = vadd.f32 0.0, %v800
    %v802 = vpop.f32.mrf.mxu0
    %v803 = vadd.f32 0.0, %v802
    %804 = vmatmul.bf16.gmra.mxu0 %v212
    %v805 = vpop.f32.mrf.mxu0
    %v806 = vadd.f32 0.0, %v805
    %v807 = vpop.f32.mrf.mxu0
    %v808 = vadd.f32 0.0, %v807
    %809 = vmatmul.bf16.gmra.mxu0 %v215
    %v810 = vpop.f32.mrf.mxu0
    %v811 = vadd.f32 0.0, %v810
    %v812 = vpop.f32.mrf.mxu0
    %v813 = vadd.f32 0.0, %v812
    %814 = vmatmul.bf16.gmra.mxu0 %v218
    %v815 = vpop.f32.mrf.mxu0
    %v816 = vadd.f32 0.0, %v815
    %v817 = vpop.f32.mrf.mxu0
    %v818 = vadd.f32 0.0, %v817
    %819 = vmatmul.bf16.gmra.mxu0 %v221
    %v820 = vpop.f32.mrf.mxu0
    %v821 = vadd.f32 0.0, %v820
    %v822 = vpop.f32.mrf.mxu0
    %v823 = vadd.f32 0.0, %v822
    %824 = vmatmul.bf16.gmra.mxu0 %v224
    %v825 = vpop.f32.mrf.mxu0
    %v826 = vadd.f32 0.0, %v825
    %v827 = vpop.f32.mrf.mxu0
    %v828 = vadd.f32 0.0, %v827
    %829 = vdwg.mxu0
    %830 = vmatpush.bf16.msra.mxu0 0
    %831 = vmatpush.bf16.msra.mxu0 0
    %832 = vmatpush.bf16.msra.mxu0 0
    %833 = vmatpush.bf16.msra.mxu0 0
    %834 = vmatpush.bf16.msra.mxu0 %v772
    %835 = vmatpush.bf16.msra.mxu0 %v770
    %836 = vmatpush.bf16.msra.mxu0 %v768
    %837 = vmatpush.bf16.msra.mxu0 %v766
    %838 = vmatmul.bf16.gmra.mxu0 %v203
    %v839 = vpop.f32.mrf.mxu0
    %v840 = vadd.f32 0.0, %v839
    %v841 = vpop.f32.mrf.mxu0
    %v842 = vadd.f32 0.0, %v841
    %843 = vmatmul.bf16.gmra.mxu0 %v206
    %v844 = vpop.f32.mrf.mxu0
    %v845 = vadd.f32 0.0, %v844
    %v846 = vpop.f32.mrf.mxu0
    %v847 = vadd.f32 0.0, %v846
    %848 = vmatmul.bf16.gmra.mxu0 %v209
    %v849 = vpop.f32.mrf.mxu0
    %v850 = vadd.f32 0.0, %v849
    %v851 = vpop.f32.mrf.mxu0
    %v852 = vadd.f32 0.0, %v851
    %853 = vmatmul.bf16.gmra.mxu0 %v212
    %v854 = vpop.f32.mrf.mxu0
    %v855 = vadd.f32 0.0, %v854
    %v856 = vpop.f32.mrf.mxu0
    %v857 = vadd.f32 0.0, %v856
    %858 = vmatmul.bf16.gmra.mxu0 %v215
    %v859 = vpop.f32.mrf.mxu0
    %v860 = vadd.f32 0.0, %v859
    %v861 = vpop.f32.mrf.mxu0
    %v862 = vadd.f32 0.0, %v861
    %863 = vmatmul.bf16.gmra.mxu0 %v218
    %v864 = vpop.f32.mrf.mxu0
    %v865 = vadd.f32 0.0, %v864
    %v866 = vpop.f32.mrf.mxu0
    %v867 = vadd.f32 0.0, %v866
    %868 = vmatmul.bf16.gmra.mxu0 %v221
    %v869 = vpop.f32.mrf.mxu0
    %v870 = vadd.f32 0.0, %v869
    %v871 = vpop.f32.mrf.mxu0
    %v872 = vadd.f32 0.0, %v871
    %873 = vmatmul.bf16.gmra.mxu0 %v224
    %v874 = vpop.f32.mrf.mxu0
    %v875 = vadd.f32 0.0, %v874
    %v876 = vpop.f32.mrf.mxu0
    %v877 = vadd.f32 0.0, %v876
    %878 = vdwg.mxu0
    %v879 = vld [vmem:[%s2 + $0x2] sm:$0x3]
    %v881 = vperm.slane %v879, 0
    %v882 = vperm.slane %v879, 1
    %v885 = vadd.f32 %v881, %v791
    %v886 = vadd.f32 %v882, %v840
    %v887 = vadd.f32 %v881, %v793
    %v888 = vadd.f32 %v882, %v842
    %v889 = vadd.f32 %v881, %v796
    %v890 = vadd.f32 %v882, %v845
    %v891 = vadd.f32 %v881, %v798
    %v892 = vadd.f32 %v882, %v847
    %v893 = vadd.f32 %v881, %v801
    %v894 = vadd.f32 %v882, %v850
    %v895 = vadd.f32 %v881, %v803
    %v896 = vadd.f32 %v882, %v852
    %v897 = vadd.f32 %v881, %v806
    %v898 = vadd.f32 %v882, %v855
    %v899 = vadd.f32 %v881, %v808
    %v900 = vadd.f32 %v882, %v857
    %v901 = vadd.f32 %v881, %v811
    %v902 = vadd.f32 %v882, %v860
    %v903 = vadd.f32 %v881, %v813
    %v904 = vadd.f32 %v882, %v862
    %v905 = vadd.f32 %v881, %v816
    %v906 = vadd.f32 %v882, %v865
    %v907 = vadd.f32 %v881, %v818
    %v908 = vadd.f32 %v882, %v867
    %v909 = vadd.f32 %v881, %v821
    %v910 = vadd.f32 %v882, %v870
    %v911 = vadd.f32 %v881, %v823
    %v912 = vadd.f32 %v882, %v872
    %v913 = vadd.f32 %v881, %v826
    %v914 = vadd.f32 %v882, %v875
    %v915 = vadd.f32 %v881, %v828
    %v916 = vadd.f32 %v882, %v877
    %v917 = vadd.s32 %v363, 256
    %v918 = vadd.s32 %v364, 256
    %v919 = vmin.f32 %v885, %v886
    %920 = vmin.xlane.f32.xlu0 %v919
    %v921 = vpop.xlane.xlu0 %920
    %v922 = vmin.f32 %v887, %v888
    %923 = vmin.xlane.f32.xlu0 %v922
    %v924 = vpop.xlane.xlu0 %923
    %v925 = vmin.f32 %v889, %v890
    %926 = vmin.xlane.f32.xlu0 %v925
    %v927 = vpop.xlane.xlu0 %926
    %v928 = vmin.f32 %v891, %v892
    %929 = vmin.xlane.f32.xlu0 %v928
    %v930 = vpop.xlane.xlu0 %929
    %v931 = vmin.f32 %v893, %v894
    %932 = vmin.xlane.f32.xlu0 %v931
    %v933 = vpop.xlane.xlu0 %932
    %v934 = vmin.f32 %v895, %v896
    %935 = vmin.xlane.f32.xlu0 %v934
    %v936 = vpop.xlane.xlu0 %935
    %v937 = vmin.f32 %v897, %v898
    %938 = vmin.xlane.f32.xlu0 %v937
    %v939 = vpop.xlane.xlu0 %938
    %v940 = vmin.f32 %v899, %v900
    %941 = vmin.xlane.f32.xlu0 %v940
    %v942 = vpop.xlane.xlu0 %941
    %v943 = vmin.f32 %v901, %v902
    %944 = vmin.xlane.f32.xlu0 %v943
    %v945 = vpop.xlane.xlu0 %944
    %v946 = vmin.f32 %v903, %v904
    %947 = vmin.xlane.f32.xlu0 %v946
    %v948 = vpop.xlane.xlu0 %947
    %v949 = vmin.f32 %v905, %v906
    %950 = vmin.xlane.f32.xlu0 %v949
    %v951 = vpop.xlane.xlu0 %950
    %v952 = vmin.f32 %v907, %v908
    %953 = vmin.xlane.f32.xlu0 %v952
    %v954 = vpop.xlane.xlu0 %953
    %v955 = vmin.f32 %v909, %v910
    %956 = vmin.xlane.f32.xlu0 %v955
    %v957 = vpop.xlane.xlu0 %956
    %v958 = vmin.f32 %v911, %v912
    %959 = vmin.xlane.f32.xlu0 %v958
    %v960 = vpop.xlane.xlu0 %959
    %v961 = vmin.f32 %v913, %v914
    %962 = vmin.xlane.f32.xlu0 %v961
    %v963 = vpop.xlane.xlu0 %962
    %v964 = vmin.f32 %v915, %v916
    %965 = vmin.xlane.f32.xlu0 %v964
    %v966 = vpop.xlane.xlu0 %965
    %vm967 = vcmp.eq.f32.partialorder %v885, %v921
    %vm968 = vcmp.eq.f32.partialorder %v886, %v921
    %vm969 = vcmp.eq.f32.partialorder %v887, %v924
    %vm970 = vcmp.eq.f32.partialorder %v888, %v924
    %vm971 = vcmp.eq.f32.partialorder %v889, %v927
    %vm972 = vcmp.eq.f32.partialorder %v890, %v927
    %vm973 = vcmp.eq.f32.partialorder %v891, %v930
    %vm974 = vcmp.eq.f32.partialorder %v892, %v930
    %vm975 = vcmp.eq.f32.partialorder %v893, %v933
    %vm976 = vcmp.eq.f32.partialorder %v894, %v933
    %vm977 = vcmp.eq.f32.partialorder %v895, %v936
    %vm978 = vcmp.eq.f32.partialorder %v896, %v936
    %vm979 = vcmp.eq.f32.partialorder %v897, %v939
    %vm980 = vcmp.eq.f32.partialorder %v898, %v939
    %vm981 = vcmp.eq.f32.partialorder %v899, %v942
    %vm982 = vcmp.eq.f32.partialorder %v900, %v942
    %vm983 = vcmp.eq.f32.partialorder %v901, %v945
    %vm984 = vcmp.eq.f32.partialorder %v902, %v945
    %vm985 = vcmp.eq.f32.partialorder %v903, %v948
    %vm986 = vcmp.eq.f32.partialorder %v904, %v948
    %vm987 = vcmp.eq.f32.partialorder %v905, %v951
    %vm988 = vcmp.eq.f32.partialorder %v906, %v951
    %vm989 = vcmp.eq.f32.partialorder %v907, %v954
    %vm990 = vcmp.eq.f32.partialorder %v908, %v954
    %vm991 = vcmp.eq.f32.partialorder %v909, %v957
    %vm992 = vcmp.eq.f32.partialorder %v910, %v957
    %vm993 = vcmp.eq.f32.partialorder %v911, %v960
    %vm994 = vcmp.eq.f32.partialorder %v912, %v960
    %vm995 = vcmp.eq.f32.partialorder %v913, %v963
    %vm996 = vcmp.eq.f32.partialorder %v914, %v963
    %vm997 = vcmp.eq.f32.partialorder %v915, %v966
    %vm998 = vcmp.eq.f32.partialorder %v916, %v966
    %v999 = vsel %vm967, %v917, 512
    %v1000 = vsel %vm968, %v918, 512
    %v1001 = vsel %vm969, %v917, 512
    %v1002 = vsel %vm970, %v918, 512
    %v1003 = vsel %vm971, %v917, 512
    %v1004 = vsel %vm972, %v918, 512
    %v1005 = vsel %vm973, %v917, 512
    %v1006 = vsel %vm974, %v918, 512
    %v1007 = vsel %vm975, %v917, 512
    %v1008 = vsel %vm976, %v918, 512
    %v1009 = vsel %vm977, %v917, 512
    %v1010 = vsel %vm978, %v918, 512
    %v1011 = vsel %vm979, %v917, 512
    %v1012 = vsel %vm980, %v918, 512
    %v1013 = vsel %vm981, %v917, 512
    %v1014 = vsel %vm982, %v918, 512
    %v1015 = vsel %vm983, %v917, 512
    %v1016 = vsel %vm984, %v918, 512
    %v1017 = vsel %vm985, %v917, 512
    %v1018 = vsel %vm986, %v918, 512
    %v1019 = vsel %vm987, %v917, 512
    %v1020 = vsel %vm988, %v918, 512
    %v1021 = vsel %vm989, %v917, 512
    %v1022 = vsel %vm990, %v918, 512
    %v1023 = vsel %vm991, %v917, 512
    %v1024 = vsel %vm992, %v918, 512
    %v1025 = vsel %vm993, %v917, 512
    %v1026 = vsel %vm994, %v918, 512
    %v1027 = vsel %vm995, %v917, 512
    %v1028 = vsel %vm996, %v918, 512
    %v1029 = vsel %vm997, %v917, 512
    %v1030 = vsel %vm998, %v918, 512
    %vm1031 = vcmp.lt.s32.totalorder %v999, %v1000
    %v1032 = vsel %vm1031, %v999, %v1000
    %v1033 = vand.u32 %v1032, 65535
    %v1034 = vshra.s32 %v1032, 16
    %v1035 = vcvt.s32.f32 %v1033
    %v1036 = vcvt.s32.f32 %v1034
    %1037 = vmin.xlane.f32.xlu0 %v1036
    %v1038 = vpop.xlane.xlu0 %1037
    %vm1039 = vcmp.eq.f32.partialorder %v1036, %v1038
    %v1040 = vsel %vm1039, %v1035, inf
    %1041 = vmin.xlane.f32.xlu0 %v1040
    %v1042 = vpop.xlane.xlu0 %1041
    %v1043 = vcvt.f32.s32 %v1042
    %v1044 = vcvt.f32.s32 %v1038
    %v1045 = vshll.u32 %v1044, 16
    %v1046 = vadd.s32 %v1045, %v1043
    %vm1047 = vcmp.lt.s32.totalorder %v1001, %v1002
    %v1048 = vsel %vm1047, %v1001, %v1002
    %v1049 = vand.u32 %v1048, 65535
    %v1050 = vshra.s32 %v1048, 16
    %v1051 = vcvt.s32.f32 %v1049
    %v1052 = vcvt.s32.f32 %v1050
    %1053 = vmin.xlane.f32.xlu0 %v1052
    %v1054 = vpop.xlane.xlu0 %1053
    %vm1055 = vcmp.eq.f32.partialorder %v1052, %v1054
    %v1056 = vsel %vm1055, %v1051, inf
    %1057 = vmin.xlane.f32.xlu0 %v1056
    %v1058 = vpop.xlane.xlu0 %1057
    %v1059 = vcvt.f32.s32 %v1058
    %v1060 = vcvt.f32.s32 %v1054
    %v1061 = vshll.u32 %v1060, 16
    %v1062 = vadd.s32 %v1061, %v1059
    %vm1063 = vcmp.lt.s32.totalorder %v1003, %v1004
    %v1064 = vsel %vm1063, %v1003, %v1004
    %v1065 = vand.u32 %v1064, 65535
    %v1066 = vshra.s32 %v1064, 16
    %v1067 = vcvt.s32.f32 %v1065
    %v1068 = vcvt.s32.f32 %v1066
    %1069 = vmin.xlane.f32.xlu0 %v1068
    %v1070 = vpop.xlane.xlu0 %1069
    %vm1071 = vcmp.eq.f32.partialorder %v1068, %v1070
    %v1072 = vsel %vm1071, %v1067, inf
    %1073 = vmin.xlane.f32.xlu0 %v1072
    %v1074 = vpop.xlane.xlu0 %1073
    %v1075 = vcvt.f32.s32 %v1074
    %v1076 = vcvt.f32.s32 %v1070
    %v1077 = vshll.u32 %v1076, 16
    %v1078 = vadd.s32 %v1077, %v1075
    %vm1079 = vcmp.lt.s32.totalorder %v1005, %v1006
    %v1080 = vsel %vm1079, %v1005, %v1006
    %v1081 = vand.u32 %v1080, 65535
    %v1082 = vshra.s32 %v1080, 16
    %v1083 = vcvt.s32.f32 %v1081
    %v1084 = vcvt.s32.f32 %v1082
    %1085 = vmin.xlane.f32.xlu0 %v1084
    %v1086 = vpop.xlane.xlu0 %1085
    %vm1087 = vcmp.eq.f32.partialorder %v1084, %v1086
    %v1088 = vsel %vm1087, %v1083, inf
    %1089 = vmin.xlane.f32.xlu0 %v1088
    %v1090 = vpop.xlane.xlu0 %1089
    %v1091 = vcvt.f32.s32 %v1090
    %v1092 = vcvt.f32.s32 %v1086
    %v1093 = vshll.u32 %v1092, 16
    %v1094 = vadd.s32 %v1093, %v1091
    %vm1095 = vcmp.lt.s32.totalorder %v1007, %v1008
    %v1096 = vsel %vm1095, %v1007, %v1008
    %v1097 = vand.u32 %v1096, 65535
    %v1098 = vshra.s32 %v1096, 16
    %v1099 = vcvt.s32.f32 %v1097
    %v1100 = vcvt.s32.f32 %v1098
    %1101 = vmin.xlane.f32.xlu0 %v1100
    %v1102 = vpop.xlane.xlu0 %1101
    %vm1103 = vcmp.eq.f32.partialorder %v1100, %v1102
    %v1104 = vsel %vm1103, %v1099, inf
    %1105 = vmin.xlane.f32.xlu0 %v1104
    %v1106 = vpop.xlane.xlu0 %1105
    %v1107 = vcvt.f32.s32 %v1106
    %v1108 = vcvt.f32.s32 %v1102
    %v1109 = vshll.u32 %v1108, 16
    %v1110 = vadd.s32 %v1109, %v1107
    %vm1111 = vcmp.lt.s32.totalorder %v1009, %v1010
    %v1112 = vsel %vm1111, %v1009, %v1010
    %v1113 = vand.u32 %v1112, 65535
    %v1114 = vshra.s32 %v1112, 16
    %v1115 = vcvt.s32.f32 %v1113
    %v1116 = vcvt.s32.f32 %v1114
    %1117 = vmin.xlane.f32.xlu0 %v1116
    %v1118 = vpop.xlane.xlu0 %1117
    %vm1119 = vcmp.eq.f32.partialorder %v1116, %v1118
    %v1120 = vsel %vm1119, %v1115, inf
    %1121 = vmin.xlane.f32.xlu0 %v1120
    %v1122 = vpop.xlane.xlu0 %1121
    %v1123 = vcvt.f32.s32 %v1122
    %v1124 = vcvt.f32.s32 %v1118
    %v1125 = vshll.u32 %v1124, 16
    %v1126 = vadd.s32 %v1125, %v1123
    %vm1127 = vcmp.lt.s32.totalorder %v1011, %v1012
    %v1128 = vsel %vm1127, %v1011, %v1012
    %v1129 = vand.u32 %v1128, 65535
    %v1130 = vshra.s32 %v1128, 16
    %v1131 = vcvt.s32.f32 %v1129
    %v1132 = vcvt.s32.f32 %v1130
    %1133 = vmin.xlane.f32.xlu0 %v1132
    %v1134 = vpop.xlane.xlu0 %1133
    %vm1135 = vcmp.eq.f32.partialorder %v1132, %v1134
    %v1136 = vsel %vm1135, %v1131, inf
    %1137 = vmin.xlane.f32.xlu0 %v1136
    %v1138 = vpop.xlane.xlu0 %1137
    %v1139 = vcvt.f32.s32 %v1138
    %v1140 = vcvt.f32.s32 %v1134
    %v1141 = vshll.u32 %v1140, 16
    %v1142 = vadd.s32 %v1141, %v1139
    %vm1143 = vcmp.lt.s32.totalorder %v1013, %v1014
    %v1144 = vsel %vm1143, %v1013, %v1014
    %v1145 = vand.u32 %v1144, 65535
    %v1146 = vshra.s32 %v1144, 16
    %v1147 = vcvt.s32.f32 %v1145
    %v1148 = vcvt.s32.f32 %v1146
    %1149 = vmin.xlane.f32.xlu0 %v1148
    %v1150 = vpop.xlane.xlu0 %1149
    %vm1151 = vcmp.eq.f32.partialorder %v1148, %v1150
    %v1152 = vsel %vm1151, %v1147, inf
    %1153 = vmin.xlane.f32.xlu0 %v1152
    %v1154 = vpop.xlane.xlu0 %1153
    %v1155 = vcvt.f32.s32 %v1154
    %v1156 = vcvt.f32.s32 %v1150
    %v1157 = vshll.u32 %v1156, 16
    %v1158 = vadd.s32 %v1157, %v1155
    %vm1159 = vcmp.lt.s32.totalorder %v1015, %v1016
    %v1160 = vsel %vm1159, %v1015, %v1016
    %v1161 = vand.u32 %v1160, 65535
    %v1162 = vshra.s32 %v1160, 16
    %v1163 = vcvt.s32.f32 %v1161
    %v1164 = vcvt.s32.f32 %v1162
    %1165 = vmin.xlane.f32.xlu0 %v1164
    %v1166 = vpop.xlane.xlu0 %1165
    %vm1167 = vcmp.eq.f32.partialorder %v1164, %v1166
    %v1168 = vsel %vm1167, %v1163, inf
    %1169 = vmin.xlane.f32.xlu0 %v1168
    %v1170 = vpop.xlane.xlu0 %1169
    %v1171 = vcvt.f32.s32 %v1170
    %v1172 = vcvt.f32.s32 %v1166
    %v1173 = vshll.u32 %v1172, 16
    %v1174 = vadd.s32 %v1173, %v1171
    %vm1175 = vcmp.lt.s32.totalorder %v1017, %v1018
    %v1176 = vsel %vm1175, %v1017, %v1018
    %v1177 = vand.u32 %v1176, 65535
    %v1178 = vshra.s32 %v1176, 16
    %v1179 = vcvt.s32.f32 %v1177
    %v1180 = vcvt.s32.f32 %v1178
    %1181 = vmin.xlane.f32.xlu0 %v1180
    %v1182 = vpop.xlane.xlu0 %1181
    %vm1183 = vcmp.eq.f32.partialorder %v1180, %v1182
    %v1184 = vsel %vm1183, %v1179, inf
    %1185 = vmin.xlane.f32.xlu0 %v1184
    %v1186 = vpop.xlane.xlu0 %1185
    %v1187 = vcvt.f32.s32 %v1186
    %v1188 = vcvt.f32.s32 %v1182
    %v1189 = vshll.u32 %v1188, 16
    %v1190 = vadd.s32 %v1189, %v1187
    %vm1191 = vcmp.lt.s32.totalorder %v1019, %v1020
    %v1192 = vsel %vm1191, %v1019, %v1020
    %v1193 = vand.u32 %v1192, 65535
    %v1194 = vshra.s32 %v1192, 16
    %v1195 = vcvt.s32.f32 %v1193
    %v1196 = vcvt.s32.f32 %v1194
    %1197 = vmin.xlane.f32.xlu0 %v1196
    %v1198 = vpop.xlane.xlu0 %1197
    %vm1199 = vcmp.eq.f32.partialorder %v1196, %v1198
    %v1200 = vsel %vm1199, %v1195, inf
    %1201 = vmin.xlane.f32.xlu0 %v1200
    %v1202 = vpop.xlane.xlu0 %1201
    %v1203 = vcvt.f32.s32 %v1202
    %v1204 = vcvt.f32.s32 %v1198
    %v1205 = vshll.u32 %v1204, 16
    %v1206 = vadd.s32 %v1205, %v1203
    %vm1207 = vcmp.lt.s32.totalorder %v1021, %v1022
    %v1208 = vsel %vm1207, %v1021, %v1022
    %v1209 = vand.u32 %v1208, 65535
    %v1210 = vshra.s32 %v1208, 16
    %v1211 = vcvt.s32.f32 %v1209
    %v1212 = vcvt.s32.f32 %v1210
    %1213 = vmin.xlane.f32.xlu0 %v1212
    %v1214 = vpop.xlane.xlu0 %1213
    %vm1215 = vcmp.eq.f32.partialorder %v1212, %v1214
    %v1216 = vsel %vm1215, %v1211, inf
    %1217 = vmin.xlane.f32.xlu0 %v1216
    %v1218 = vpop.xlane.xlu0 %1217
    %v1219 = vcvt.f32.s32 %v1218
    %v1220 = vcvt.f32.s32 %v1214
    %v1221 = vshll.u32 %v1220, 16
    %v1222 = vadd.s32 %v1221, %v1219
    %vm1223 = vcmp.lt.s32.totalorder %v1023, %v1024
    %v1224 = vsel %vm1223, %v1023, %v1024
    %v1225 = vand.u32 %v1224, 65535
    %v1226 = vshra.s32 %v1224, 16
    %v1227 = vcvt.s32.f32 %v1225
    %v1228 = vcvt.s32.f32 %v1226
    %1229 = vmin.xlane.f32.xlu0 %v1228
    %v1230 = vpop.xlane.xlu0 %1229
    %vm1231 = vcmp.eq.f32.partialorder %v1228, %v1230
    %v1232 = vsel %vm1231, %v1227, inf
    %1233 = vmin.xlane.f32.xlu0 %v1232
    %v1234 = vpop.xlane.xlu0 %1233
    %v1235 = vcvt.f32.s32 %v1234
    %v1236 = vcvt.f32.s32 %v1230
    %v1237 = vshll.u32 %v1236, 16
    %v1238 = vadd.s32 %v1237, %v1235
    %vm1239 = vcmp.lt.s32.totalorder %v1025, %v1026
    %v1240 = vsel %vm1239, %v1025, %v1026
    %v1241 = vand.u32 %v1240, 65535
    %v1242 = vshra.s32 %v1240, 16
    %v1243 = vcvt.s32.f32 %v1241
    %v1244 = vcvt.s32.f32 %v1242
    %1245 = vmin.xlane.f32.xlu0 %v1244
    %v1246 = vpop.xlane.xlu0 %1245
    %vm1247 = vcmp.eq.f32.partialorder %v1244, %v1246
    %v1248 = vsel %vm1247, %v1243, inf
    %1249 = vmin.xlane.f32.xlu0 %v1248
    %v1250 = vpop.xlane.xlu0 %1249
    %v1251 = vcvt.f32.s32 %v1250
    %v1252 = vcvt.f32.s32 %v1246
    %v1253 = vshll.u32 %v1252, 16
    %v1254 = vadd.s32 %v1253, %v1251
    %vm1255 = vcmp.lt.s32.totalorder %v1027, %v1028
    %v1256 = vsel %vm1255, %v1027, %v1028
    %v1257 = vand.u32 %v1256, 65535
    %v1258 = vshra.s32 %v1256, 16
    %v1259 = vcvt.s32.f32 %v1257
    %v1260 = vcvt.s32.f32 %v1258
    %1261 = vmin.xlane.f32.xlu0 %v1260
    %v1262 = vpop.xlane.xlu0 %1261
    %vm1263 = vcmp.eq.f32.partialorder %v1260, %v1262
    %v1264 = vsel %vm1263, %v1259, inf
    %1265 = vmin.xlane.f32.xlu0 %v1264
    %v1266 = vpop.xlane.xlu0 %1265
    %v1267 = vcvt.f32.s32 %v1266
    %v1268 = vcvt.f32.s32 %v1262
    %v1269 = vshll.u32 %v1268, 16
    %v1270 = vadd.s32 %v1269, %v1267
    %vm1271 = vcmp.lt.s32.totalorder %v1029, %v1030
    %v1272 = vsel %vm1271, %v1029, %v1030
    %v1273 = vand.u32 %v1272, 65535
    %v1274 = vshra.s32 %v1272, 16
    %v1275 = vcvt.s32.f32 %v1273
    %v1276 = vcvt.s32.f32 %v1274
    %1277 = vmin.xlane.f32.xlu0 %v1276
    %v1278 = vpop.xlane.xlu0 %1277
    %vm1279 = vcmp.eq.f32.partialorder %v1276, %v1278
    %v1280 = vsel %vm1279, %v1275, inf
    %1281 = vmin.xlane.f32.xlu0 %v1280
    %v1282 = vpop.xlane.xlu0 %1281
    %v1283 = vcvt.f32.s32 %v1282
    %v1284 = vcvt.f32.s32 %v1278
    %v1285 = vshll.u32 %v1284, 16
    %v1286 = vadd.s32 %v1285, %v1283
    %vm1287 = vcmp.lt.f32.partialorder %v921, %v367
    %vm1288 = vcmp.lt.f32.partialorder %v924, %v370
    %vm1289 = vcmp.lt.f32.partialorder %v927, %v373
    %vm1290 = vcmp.lt.f32.partialorder %v930, %v376
    %vm1291 = vcmp.lt.f32.partialorder %v933, %v379
    %vm1292 = vcmp.lt.f32.partialorder %v936, %v382
    %vm1293 = vcmp.lt.f32.partialorder %v939, %v385
    %vm1294 = vcmp.lt.f32.partialorder %v942, %v388
    %vm1295 = vcmp.lt.f32.partialorder %v945, %v391
    %vm1296 = vcmp.lt.f32.partialorder %v948, %v394
    %vm1297 = vcmp.lt.f32.partialorder %v951, %v397
    %vm1298 = vcmp.lt.f32.partialorder %v954, %v400
    %vm1299 = vcmp.lt.f32.partialorder %v957, %v403
    %vm1300 = vcmp.lt.f32.partialorder %v960, %v406
    %vm1301 = vcmp.lt.f32.partialorder %v963, %v409
    %vm1302 = vcmp.lt.f32.partialorder %v966, %v412
    %v1303 = vsel %vm1287, %v1046, %v492
    %v1304 = vsel %vm1288, %v1062, %v508
    %v1305 = vsel %vm1289, %v1078, %v524
    %v1306 = vsel %vm1290, %v1094, %v540
    %v1307 = vsel %vm1291, %v1110, %v556
    %v1308 = vsel %vm1292, %v1126, %v572
    %v1309 = vsel %vm1293, %v1142, %v588
    %v1310 = vsel %vm1294, %v1158, %v604
    %v1311 = vsel %vm1295, %v1174, %v620
    %v1312 = vsel %vm1296, %v1190, %v636
    %v1313 = vsel %vm1297, %v1206, %v652
    %v1314 = vsel %vm1298, %v1222, %v668
    %v1315 = vsel %vm1299, %v1238, %v684
    %v1316 = vsel %vm1300, %v1254, %v700
    %v1317 = vsel %vm1301, %v1270, %v716
    %v1318 = vsel %vm1302, %v1286, %v732
    %vm1319 = vcmask 7168
    %1320 = vst.msk [vmem:[%s51] sm:$0xff] %vm1319, %v1303
    %1321 = vst.msk [vmem:[%s51 + $0x8] sm:$0xff] %vm1319, %v1304
    %1322 = vst.msk [vmem:[%s51 + $0x10] sm:$0xff] %vm1319, %v1305
    %1323 = vst.msk [vmem:[%s51 + $0x18] sm:$0xff] %vm1319, %v1306
    %1324 = vst.msk [vmem:[%s51 + $0x20] sm:$0xff] %vm1319, %v1307
    %1325 = vst.msk [vmem:[%s51 + $0x28] sm:$0xff] %vm1319, %v1308
    %1326 = vst.msk [vmem:[%s51 + $0x30] sm:$0xff] %vm1319, %v1309
    %1327 = vst.msk [vmem:[%s51 + $0x38] sm:$0xff] %vm1319, %v1310
    %1328 = vst.msk [vmem:[%s51 + $0x40] sm:$0xff] %vm1319, %v1311
    %1329 = vst.msk [vmem:[%s51 + $0x48] sm:$0xff] %vm1319, %v1312
    %1330 = vst.msk [vmem:[%s51 + $0x50] sm:$0xff] %vm1319, %v1313
    %1331 = vst.msk [vmem:[%s51 + $0x58] sm:$0xff] %vm1319, %v1314
    %1332 = vst.msk [vmem:[%s51 + $0x60] sm:$0xff] %vm1319, %v1315
    %1333 = vst.msk [vmem:[%s51 + $0x68] sm:$0xff] %vm1319, %v1316
    %1334 = vst.msk [vmem:[%s51 + $0x70] sm:$0xff] %vm1319, %v1317
    %1335 = vst.msk [vmem:[%s51 + $0x78] sm:$0xff] %vm1319, %v1318
    %vm1336 = vcmp.eq.s32.totalorder %v363, %v1303
    %vm1337 = vcmp.eq.s32.totalorder %v364, %v1303
    %vm1338 = vcmp.eq.s32.totalorder %v363, %v1304
    %vm1339 = vcmp.eq.s32.totalorder %v364, %v1304
    %vm1340 = vcmp.eq.s32.totalorder %v363, %v1305
    %vm1341 = vcmp.eq.s32.totalorder %v364, %v1305
    %vm1342 = vcmp.eq.s32.totalorder %v363, %v1306
    %vm1343 = vcmp.eq.s32.totalorder %v364, %v1306
    %vm1344 = vcmp.eq.s32.totalorder %v363, %v1307
    %vm1345 = vcmp.eq.s32.totalorder %v364, %v1307
    %vm1346 = vcmp.eq.s32.totalorder %v363, %v1308
    %vm1347 = vcmp.eq.s32.totalorder %v364, %v1308
    %vm1348 = vcmp.eq.s32.totalorder %v363, %v1309
    %vm1349 = vcmp.eq.s32.totalorder %v364, %v1309
    %vm1350 = vcmp.eq.s32.totalorder %v363, %v1310
    %vm1351 = vcmp.eq.s32.totalorder %v364, %v1310
    %vm1352 = vcmp.eq.s32.totalorder %v363, %v1311
    %vm1353 = vcmp.eq.s32.totalorder %v364, %v1311
    %vm1354 = vcmp.eq.s32.totalorder %v363, %v1312
    %vm1355 = vcmp.eq.s32.totalorder %v364, %v1312
    %vm1356 = vcmp.eq.s32.totalorder %v363, %v1313
    %vm1357 = vcmp.eq.s32.totalorder %v364, %v1313
    %vm1358 = vcmp.eq.s32.totalorder %v363, %v1314
    %vm1359 = vcmp.eq.s32.totalorder %v364, %v1314
    %vm1360 = vcmp.eq.s32.totalorder %v363, %v1315
    %vm1361 = vcmp.eq.s32.totalorder %v364, %v1315
    %vm1362 = vcmp.eq.s32.totalorder %v363, %v1316
    %vm1363 = vcmp.eq.s32.totalorder %v364, %v1316
    %vm1364 = vcmp.eq.s32.totalorder %v363, %v1317
    %vm1365 = vcmp.eq.s32.totalorder %v364, %v1317
    %vm1366 = vcmp.eq.s32.totalorder %v363, %v1318
    %vm1367 = vcmp.eq.s32.totalorder %v364, %v1318
    %v1368 = vsel %vm1336, 1, 0
    %v1369 = vsel %vm1337, 1, 0
    %v1370 = vsel %vm1338, 1, 0
    %v1371 = vsel %vm1339, 1, 0
    %v1372 = vsel %vm1340, 1, 0
    %v1373 = vsel %vm1341, 1, 0
    %v1374 = vsel %vm1342, 1, 0
    %v1375 = vsel %vm1343, 1, 0
    %v1376 = vsel %vm1344, 1, 0
    %v1377 = vsel %vm1345, 1, 0
    %v1378 = vsel %vm1346, 1, 0
    %v1379 = vsel %vm1347, 1, 0
    %v1380 = vsel %vm1348, 1, 0
    %v1381 = vsel %vm1349, 1, 0
    %v1382 = vsel %vm1350, 1, 0
    %v1383 = vsel %vm1351, 1, 0
    %v1384 = vsel %vm1352, 1, 0
    %v1385 = vsel %vm1353, 1, 0
    %v1386 = vsel %vm1354, 1, 0
    %v1387 = vsel %vm1355, 1, 0
    %v1388 = vsel %vm1356, 1, 0
    %v1389 = vsel %vm1357, 1, 0
    %v1390 = vsel %vm1358, 1, 0
    %v1391 = vsel %vm1359, 1, 0
    %v1392 = vsel %vm1360, 1, 0
    %v1393 = vsel %vm1361, 1, 0
    %v1394 = vsel %vm1362, 1, 0
    %v1395 = vsel %vm1363, 1, 0
    %v1396 = vsel %vm1364, 1, 0
    %v1397 = vsel %vm1365, 1, 0
    %v1398 = vsel %vm1366, 1, 0
    %v1399 = vsel %vm1367, 1, 0
    %v1400 = vcvt.s32.f32 %v1368
    %v1401 = vcvt.s32.f32 %v1369
    %v1402 = vcvt.s32.f32 %v1370
    %v1403 = vcvt.s32.f32 %v1371
    %v1404 = vcvt.s32.f32 %v1372
    %v1405 = vcvt.s32.f32 %v1373
    %v1406 = vcvt.s32.f32 %v1374
    %v1407 = vcvt.s32.f32 %v1375
    %v1408 = vcvt.s32.f32 %v1376
    %v1409 = vcvt.s32.f32 %v1377
    %v1410 = vcvt.s32.f32 %v1378
    %v1411 = vcvt.s32.f32 %v1379
    %v1412 = vcvt.s32.f32 %v1380
    %v1413 = vcvt.s32.f32 %v1381
    %v1414 = vcvt.s32.f32 %v1382
    %v1415 = vcvt.s32.f32 %v1383
    %v1416 = vcvt.s32.f32 %v1384
    %v1417 = vcvt.s32.f32 %v1385
    %v1418 = vcvt.s32.f32 %v1386
    %v1419 = vcvt.s32.f32 %v1387
    %v1420 = vcvt.s32.f32 %v1388
    %v1421 = vcvt.s32.f32 %v1389
    %v1422 = vcvt.s32.f32 %v1390
    %v1423 = vcvt.s32.f32 %v1391
    %v1424 = vcvt.s32.f32 %v1392
    %v1425 = vcvt.s32.f32 %v1393
    %v1426 = vcvt.s32.f32 %v1394
    %v1427 = vcvt.s32.f32 %v1395
    %v1428 = vcvt.s32.f32 %v1396
    %v1429 = vcvt.s32.f32 %v1397
    %v1430 = vcvt.s32.f32 %v1398
    %v1431 = vcvt.s32.f32 %v1399
    %v1432 = vld [vmem:[#allocation2] sm:$0x3]
    %v1433 = vadd.f32 %v1400, %v1402
    %v1434 = vadd.f32 %v1433, %v1404
    %v1435 = vadd.f32 %v1434, %v1406
    %v1436 = vadd.f32 %v1435, %v1408
    %v1437 = vadd.f32 %v1436, %v1410
    %v1438 = vadd.f32 %v1437, %v1412
    %v1439 = vadd.f32 %v1438, %v1414
    %v1440 = vadd.f32 %v1439, %v1416
    %v1441 = vadd.f32 %v1440, %v1418
    %v1442 = vadd.f32 %v1441, %v1420
    %v1443 = vadd.f32 %v1442, %v1422
    %v1444 = vadd.f32 %v1443, %v1424
    %v1445 = vadd.f32 %v1444, %v1426
    %v1446 = vadd.f32 %v1445, %v1428
    %v1447 = vadd.f32 %v1446, %v1430
    %v1448 = vrot.slane %v1447, 4
    %v1449 = vadd.f32 %v1447, %v1448
    %v1450 = vrot.slane %v1449, 2
    %v1451 = vadd.f32 %v1449, %v1450
    %v1452 = vrot.slane %v1451, 1
    %v1453 = vadd.f32 %v1451, %v1452
    %v1454 = vadd.f32 %v1401, %v1403
    %v1455 = vadd.f32 %v1454, %v1405
    %v1456 = vadd.f32 %v1455, %v1407
    %v1457 = vadd.f32 %v1456, %v1409
    %v1458 = vadd.f32 %v1457, %v1411
    %v1459 = vadd.f32 %v1458, %v1413
    %v1460 = vadd.f32 %v1459, %v1415
    %v1461 = vadd.f32 %v1460, %v1417
    %v1462 = vadd.f32 %v1461, %v1419
    %v1463 = vadd.f32 %v1462, %v1421
    %v1464 = vadd.f32 %v1463, %v1423
    %v1465 = vadd.f32 %v1464, %v1425
    %v1466 = vadd.f32 %v1465, %v1427
    %v1467 = vadd.f32 %v1466, %v1429
    %v1468 = vadd.f32 %v1467, %v1431
    %v1469 = vrot.slane %v1468, 4
    %v1470 = vadd.f32 %v1468, %v1469
    %v1471 = vrot.slane %v1470, 2
    %v1472 = vadd.f32 %v1470, %v1471
    %v1473 = vrot.slane %v1472, 1
    %v1474 = vadd.f32 %v1472, %v1473
    %v1477 = vrot.slane %v1474, 7
    %vm1478 = vcmask 1040384
    %v1479 = vsel %vm1478, %v1453, %v1477
    %v1481 = vadd.f32 %v1432, %v1479
    %v1482 = vlaneseq
    %vm1483 = vcmp.ge.s32.totalorder %v1482, 0
    %vm1484 = vcmp.lt.s32.totalorder %v1482, 256
    %vm1485 = vmand %vm1483, %vm1484
    %1486 = vst.msk [vmem:[#allocation2] sm:$0x3] %vm1485, %v1481
    %v1487 = vpack.c.bf16 %v1402, %v1400
    %v1488 = vpack.c.bf16 %v1403, %v1401
    %v1489 = vpack.c.bf16 %v1406, %v1404
    %v1490 = vpack.c.bf16 %v1407, %v1405
    %v1491 = vpack.c.bf16 %v1410, %v1408
    %v1492 = vpack.c.bf16 %v1411, %v1409
    %v1493 = vpack.c.bf16 %v1414, %v1412
    %v1494 = vpack.c.bf16 %v1415, %v1413
    %v1495 = vpack.c.bf16 %v1418, %v1416
    %v1496 = vpack.c.bf16 %v1419, %v1417
    %v1497 = vpack.c.bf16 %v1422, %v1420
    %v1498 = vpack.c.bf16 %v1423, %v1421
    %v1499 = vpack.c.bf16 %v1426, %v1424
    %v1500 = vpack.c.bf16 %v1427, %v1425
    %v1501 = vpack.c.bf16 %v1430, %v1428
    %v1502 = vpack.c.bf16 %v1431, %v1429
    %1503 = vxpose.binary.xlu0.c.b16.start [1/16] %v1488, %v1487, 128
    %1504 = vxpose.binary.xlu0.c.b16.cont [2/16] %v1490, %v1489, 128
    %1505 = vxpose.binary.xlu0.c.b16.cont [3/16] %v1492, %v1491, 128
    %1506 = vxpose.binary.xlu0.c.b16.cont [4/16] %v1494, %v1493, 128
    %1507 = vxpose.binary.xlu0.c.b16.cont [5/16] %v1496, %v1495, 128
    %1508 = vxpose.binary.xlu0.c.b16.cont [6/16] %v1498, %v1497, 128
    %1509 = vxpose.binary.xlu0.c.b16.cont [7/16] %v1500, %v1499, 128
    %1510 = vxpose.binary.xlu0.c.b16.end [8/16] %v1502, %v1501, 128
    %v1511 = vpop.trf.xlu0
    %v1512 = vpop.trf.xlu0
    %v1513 = vpop.trf.xlu0
    %v1514 = vpop.trf.xlu0
    %v1515 = vpop.trf.xlu0
    %v1516 = vpop.trf.xlu0
    %v1517 = vpop.trf.xlu0
    %v1518 = vpop.trf.xlu0
    %v1519 = vpop.trf.xlu0
    %v1520 = vpop.trf.xlu0
    %v1521 = vpop.trf.xlu0
    %v1522 = vpop.trf.xlu0
    %v1523 = vpop.trf.xlu0
    %v1524 = vpop.trf.xlu0
    %v1525 = vpop.trf.xlu0
    %v1526 = vpop.trf.xlu0
    %1527 = vmatpush.bf16.msra.mxu0 %v152
    %1528 = vmatpush.bf16.msra.mxu0 %v151
    %1529 = vmatpush.bf16.msra.mxu0 %v150
    %1530 = vmatpush.bf16.msra.mxu0 %v149
    %1531 = vmatpush.bf16.msra.mxu0 %v148
    %1532 = vmatpush.bf16.msra.mxu0 %v147
    %1533 = vmatpush.bf16.msra.mxu0 %v146
    %1534 = vmatpush.bf16.msra.mxu0 %v145
    %1535 = vmatmul.bf16.gmra.mxu0 %v1511
    %v1536 = vpop.f32.mrf.mxu0
    %v1537 = vadd.f32 0.0, %v1536
    %v1538 = vpop.f32.mrf.mxu0
    %v1539 = vadd.f32 0.0, %v1538
    %1540 = vmatmul.bf16.gmra.mxu0 %v1513
    %v1541 = vpop.f32.mrf.mxu0
    %v1542 = vadd.f32 0.0, %v1541
    %v1543 = vpop.f32.mrf.mxu0
    %v1544 = vadd.f32 0.0, %v1543
    %1545 = vmatmul.bf16.gmra.mxu0 %v1515
    %v1546 = vpop.f32.mrf.mxu0
    %v1547 = vadd.f32 0.0, %v1546
    %v1548 = vpop.f32.mrf.mxu0
    %v1549 = vadd.f32 0.0, %v1548
    %1550 = vmatmul.bf16.gmra.mxu0 %v1517
    %v1551 = vpop.f32.mrf.mxu0
    %v1552 = vadd.f32 0.0, %v1551
    %v1553 = vpop.f32.mrf.mxu0
    %v1554 = vadd.f32 0.0, %v1553
    %1555 = vmatmul.bf16.gmra.mxu0 %v1519
    %v1556 = vpop.f32.mrf.mxu0
    %v1557 = vadd.f32 0.0, %v1556
    %v1558 = vpop.f32.mrf.mxu0
    %v1559 = vadd.f32 0.0, %v1558
    %1560 = vmatmul.bf16.gmra.mxu0 %v1521
    %v1561 = vpop.f32.mrf.mxu0
    %v1562 = vadd.f32 0.0, %v1561
    %v1563 = vpop.f32.mrf.mxu0
    %v1564 = vadd.f32 0.0, %v1563
    %1565 = vmatmul.bf16.gmra.mxu0 %v1523
    %v1566 = vpop.f32.mrf.mxu0
    %v1567 = vadd.f32 0.0, %v1566
    %v1568 = vpop.f32.mrf.mxu0
    %v1569 = vadd.f32 0.0, %v1568
    %1570 = vmatmul.bf16.gmra.mxu0 %v1525
    %v1571 = vpop.f32.mrf.mxu0
    %v1572 = vadd.f32 0.0, %v1571
    %v1573 = vpop.f32.mrf.mxu0
    %v1574 = vadd.f32 0.0, %v1573
    %1575 = vmatmul.bf16.gmra.mxu0 %v1512
    %v1576 = vpop.f32.mrf.mxu0
    %v1577 = vadd.f32 0.0, %v1576
    %v1578 = vpop.f32.mrf.mxu0
    %v1579 = vadd.f32 0.0, %v1578
    %1580 = vmatmul.bf16.gmra.mxu0 %v1514
    %v1581 = vpop.f32.mrf.mxu0
    %v1582 = vadd.f32 0.0, %v1581
    %v1583 = vpop.f32.mrf.mxu0
    %v1584 = vadd.f32 0.0, %v1583
    %1585 = vmatmul.bf16.gmra.mxu0 %v1516
    %v1586 = vpop.f32.mrf.mxu0
    %v1587 = vadd.f32 0.0, %v1586
    %v1588 = vpop.f32.mrf.mxu0
    %v1589 = vadd.f32 0.0, %v1588
    %1590 = vmatmul.bf16.gmra.mxu0 %v1518
    %v1591 = vpop.f32.mrf.mxu0
    %v1592 = vadd.f32 0.0, %v1591
    %v1593 = vpop.f32.mrf.mxu0
    %v1594 = vadd.f32 0.0, %v1593
    %1595 = vmatmul.bf16.gmra.mxu0 %v1520
    %v1596 = vpop.f32.mrf.mxu0
    %v1597 = vadd.f32 0.0, %v1596
    %v1598 = vpop.f32.mrf.mxu0
    %v1599 = vadd.f32 0.0, %v1598
    %1600 = vmatmul.bf16.gmra.mxu0 %v1522
    %v1601 = vpop.f32.mrf.mxu0
    %v1602 = vadd.f32 0.0, %v1601
    %v1603 = vpop.f32.mrf.mxu0
    %v1604 = vadd.f32 0.0, %v1603
    %1605 = vmatmul.bf16.gmra.mxu0 %v1524
    %v1606 = vpop.f32.mrf.mxu0
    %v1607 = vadd.f32 0.0, %v1606
    %v1608 = vpop.f32.mrf.mxu0
    %v1609 = vadd.f32 0.0, %v1608
    %1610 = vmatmul.bf16.gmra.mxu0 %v1526
    %v1611 = vpop.f32.mrf.mxu0
    %v1612 = vadd.f32 0.0, %v1611
    %v1613 = vpop.f32.mrf.mxu0
    %v1614 = vadd.f32 0.0, %v1613
    %1615 = vdwg.mxu0
    %v1616 = vld [vmem:[%s4] sm:$0xff]
    %v1617 = vld [vmem:[%s4 + $0x8] sm:$0xff]
    %v1618 = vld [vmem:[%s4 + $0x10] sm:$0xff]
    %v1619 = vld [vmem:[%s4 + $0x18] sm:$0xff]
    %v1620 = vld [vmem:[%s4 + $0x20] sm:$0xff]
    %v1621 = vld [vmem:[%s4 + $0x28] sm:$0xff]
    %v1622 = vld [vmem:[%s4 + $0x30] sm:$0xff]
    %v1623 = vld [vmem:[%s4 + $0x38] sm:$0xff]
    %v1624 = vld [vmem:[%s4 + $0x40] sm:$0xff]
    %v1625 = vld [vmem:[%s4 + $0x48] sm:$0xff]
    %v1626 = vld [vmem:[%s4 + $0x50] sm:$0xff]
    %v1627 = vld [vmem:[%s4 + $0x58] sm:$0xff]
    %v1628 = vld [vmem:[%s4 + $0x60] sm:$0xff]
    %v1629 = vld [vmem:[%s4 + $0x68] sm:$0xff]
    %v1630 = vld [vmem:[%s4 + $0x70] sm:$0xff]
    %v1631 = vld [vmem:[%s4 + $0x78] sm:$0xff]
    %v1632 = vld [vmem:[%s4 + $0x80] sm:$0xff]
    %v1633 = vld [vmem:[%s4 + $0x88] sm:$0xff]
    %v1634 = vld [vmem:[%s4 + $0x90] sm:$0xff]
    %v1635 = vld [vmem:[%s4 + $0x98] sm:$0xff]
    %v1636 = vld [vmem:[%s4 + $0xa0] sm:$0xff]
    %v1637 = vld [vmem:[%s4 + $0xa8] sm:$0xff]
    %v1638 = vld [vmem:[%s4 + $0xb0] sm:$0xff]
    %v1639 = vld [vmem:[%s4 + $0xb8] sm:$0xff]
    %v1640 = vld [vmem:[%s4 + $0xc0] sm:$0xff]
    %v1641 = vld [vmem:[%s4 + $0xc8] sm:$0xff]
    %v1642 = vld [vmem:[%s4 + $0xd0] sm:$0xff]
    %v1643 = vld [vmem:[%s4 + $0xd8] sm:$0xff]
    %v1644 = vld [vmem:[%s4 + $0xe0] sm:$0xff]
    %v1645 = vld [vmem:[%s4 + $0xe8] sm:$0xff]
    %v1646 = vld [vmem:[%s4 + $0xf0] sm:$0xff]
    %v1647 = vld [vmem:[%s4 + $0xf8] sm:$0xff]
    %v1648 = vadd.f32 %v1616, %v1537
    %v1649 = vadd.f32 %v1617, %v1539
    %v1650 = vadd.f32 %v1618, %v1542
    %v1651 = vadd.f32 %v1619, %v1544
    %v1652 = vadd.f32 %v1620, %v1547
    %v1653 = vadd.f32 %v1621, %v1549
    %v1654 = vadd.f32 %v1622, %v1552
    %v1655 = vadd.f32 %v1623, %v1554
    %v1656 = vadd.f32 %v1624, %v1557
    %v1657 = vadd.f32 %v1625, %v1559
    %v1658 = vadd.f32 %v1626, %v1562
    %v1659 = vadd.f32 %v1627, %v1564
    %v1660 = vadd.f32 %v1628, %v1567
    %v1661 = vadd.f32 %v1629, %v1569
    %v1662 = vadd.f32 %v1630, %v1572
    %v1663 = vadd.f32 %v1631, %v1574
    %v1664 = vadd.f32 %v1632, %v1577
    %v1665 = vadd.f32 %v1633, %v1579
    %v1666 = vadd.f32 %v1634, %v1582
    %v1667 = vadd.f32 %v1635, %v1584
    %v1668 = vadd.f32 %v1636, %v1587
    %v1669 = vadd.f32 %v1637, %v1589
    %v1670 = vadd.f32 %v1638, %v1592
    %v1671 = vadd.f32 %v1639, %v1594
    %v1672 = vadd.f32 %v1640, %v1597
    %v1673 = vadd.f32 %v1641, %v1599
    %v1674 = vadd.f32 %v1642, %v1602
    %v1675 = vadd.f32 %v1643, %v1604
    %v1676 = vadd.f32 %v1644, %v1607
    %v1677 = vadd.f32 %v1645, %v1609
    %v1678 = vadd.f32 %v1646, %v1612
    %v1679 = vadd.f32 %v1647, %v1614
    %1680 = vst.msk [vmem:[%s4] sm:$0xff] %vm201, %v1648
    %1681 = vst.msk [vmem:[%s4 + $0x8] sm:$0xff] %vm201, %v1649
    %1682 = vst.msk [vmem:[%s4 + $0x10] sm:$0xff] %vm201, %v1650
    %1683 = vst.msk [vmem:[%s4 + $0x18] sm:$0xff] %vm201, %v1651
    %1684 = vst.msk [vmem:[%s4 + $0x20] sm:$0xff] %vm201, %v1652
    %1685 = vst.msk [vmem:[%s4 + $0x28] sm:$0xff] %vm201, %v1653
    %1686 = vst.msk [vmem:[%s4 + $0x30] sm:$0xff] %vm201, %v1654
    %1687 = vst.msk [vmem:[%s4 + $0x38] sm:$0xff] %vm201, %v1655
    %1688 = vst.msk [vmem:[%s4 + $0x40] sm:$0xff] %vm201, %v1656
    %1689 = vst.msk [vmem:[%s4 + $0x48] sm:$0xff] %vm201, %v1657
    %1690 = vst.msk [vmem:[%s4 + $0x50] sm:$0xff] %vm201, %v1658
    %1691 = vst.msk [vmem:[%s4 + $0x58] sm:$0xff] %vm201, %v1659
    %1692 = vst.msk [vmem:[%s4 + $0x60] sm:$0xff] %vm201, %v1660
    %1693 = vst.msk [vmem:[%s4 + $0x68] sm:$0xff] %vm201, %v1661
    %1694 = vst.msk [vmem:[%s4 + $0x70] sm:$0xff] %vm201, %v1662
    %1695 = vst.msk [vmem:[%s4 + $0x78] sm:$0xff] %vm201, %v1663
    %1696 = vst.msk [vmem:[%s4 + $0x80] sm:$0xff] %vm201, %v1664
    %1697 = vst.msk [vmem:[%s4 + $0x88] sm:$0xff] %vm201, %v1665
    %1698 = vst.msk [vmem:[%s4 + $0x90] sm:$0xff] %vm201, %v1666
    %1699 = vst.msk [vmem:[%s4 + $0x98] sm:$0xff] %vm201, %v1667
    %1700 = vst.msk [vmem:[%s4 + $0xa0] sm:$0xff] %vm201, %v1668
    %1701 = vst.msk [vmem:[%s4 + $0xa8] sm:$0xff] %vm201, %v1669
    %1702 = vst.msk [vmem:[%s4 + $0xb0] sm:$0xff] %vm201, %v1670
    %1703 = vst.msk [vmem:[%s4 + $0xb8] sm:$0xff] %vm201, %v1671
    %1704 = vst.msk [vmem:[%s4 + $0xc0] sm:$0xff] %vm201, %v1672
    %1705 = vst.msk [vmem:[%s4 + $0xc8] sm:$0xff] %vm201, %v1673
    %1706 = vst.msk [vmem:[%s4 + $0xd0] sm:$0xff] %vm201, %v1674
    %1707 = vst.msk [vmem:[%s4 + $0xd8] sm:$0xff] %vm201, %v1675
    %1708 = vst.msk [vmem:[%s4 + $0xe0] sm:$0xff] %vm201, %v1676
    %1709 = vst.msk [vmem:[%s4 + $0xe8] sm:$0xff] %vm201, %v1677
    %1710 = vst.msk [vmem:[%s4 + $0xf0] sm:$0xff] %vm201, %v1678
    %1711 = vst.msk [vmem:[%s4 + $0xf8] sm:$0xff] %vm201, %v1679
    %vm1712 = vcmp.eq.s32.totalorder %v917, %v1303
    %vm1713 = vcmp.eq.s32.totalorder %v918, %v1303
    %vm1714 = vcmp.eq.s32.totalorder %v917, %v1304
    %vm1715 = vcmp.eq.s32.totalorder %v918, %v1304
    %vm1716 = vcmp.eq.s32.totalorder %v917, %v1305
    %vm1717 = vcmp.eq.s32.totalorder %v918, %v1305
    %vm1718 = vcmp.eq.s32.totalorder %v917, %v1306
    %vm1719 = vcmp.eq.s32.totalorder %v918, %v1306
    %vm1720 = vcmp.eq.s32.totalorder %v917, %v1307
    %vm1721 = vcmp.eq.s32.totalorder %v918, %v1307
    %vm1722 = vcmp.eq.s32.totalorder %v917, %v1308
    %vm1723 = vcmp.eq.s32.totalorder %v918, %v1308
    %vm1724 = vcmp.eq.s32.totalorder %v917, %v1309
    %vm1725 = vcmp.eq.s32.totalorder %v918, %v1309
    %vm1726 = vcmp.eq.s32.totalorder %v917, %v1310
    %vm1727 = vcmp.eq.s32.totalorder %v918, %v1310
    %vm1728 = vcmp.eq.s32.totalorder %v917, %v1311
    %vm1729 = vcmp.eq.s32.totalorder %v918, %v1311
    %vm1730 = vcmp.eq.s32.totalorder %v917, %v1312
    %vm1731 = vcmp.eq.s32.totalorder %v918, %v1312
    %vm1732 = vcmp.eq.s32.totalorder %v917, %v1313
    %vm1733 = vcmp.eq.s32.totalorder %v918, %v1313
    %vm1734 = vcmp.eq.s32.totalorder %v917, %v1314
    %vm1735 = vcmp.eq.s32.totalorder %v918, %v1314
    %vm1736 = vcmp.eq.s32.totalorder %v917, %v1315
    %vm1737 = vcmp.eq.s32.totalorder %v918, %v1315
    %vm1738 = vcmp.eq.s32.totalorder %v917, %v1316
    %vm1739 = vcmp.eq.s32.totalorder %v918, %v1316
    %vm1740 = vcmp.eq.s32.totalorder %v917, %v1317
    %vm1741 = vcmp.eq.s32.totalorder %v918, %v1317
    %vm1742 = vcmp.eq.s32.totalorder %v917, %v1318
    %vm1743 = vcmp.eq.s32.totalorder %v918, %v1318
    %v1744 = vsel %vm1712, 1, 0
    %v1745 = vsel %vm1713, 1, 0
    %v1746 = vsel %vm1714, 1, 0
    %v1747 = vsel %vm1715, 1, 0
    %v1748 = vsel %vm1716, 1, 0
    %v1749 = vsel %vm1717, 1, 0
    %v1750 = vsel %vm1718, 1, 0
    %v1751 = vsel %vm1719, 1, 0
    %v1752 = vsel %vm1720, 1, 0
    %v1753 = vsel %vm1721, 1, 0
    %v1754 = vsel %vm1722, 1, 0
    %v1755 = vsel %vm1723, 1, 0
    %v1756 = vsel %vm1724, 1, 0
    %v1757 = vsel %vm1725, 1, 0
    %v1758 = vsel %vm1726, 1, 0
    %v1759 = vsel %vm1727, 1, 0
    %v1760 = vsel %vm1728, 1, 0
    %v1761 = vsel %vm1729, 1, 0
    %v1762 = vsel %vm1730, 1, 0
    %v1763 = vsel %vm1731, 1, 0
    %v1764 = vsel %vm1732, 1, 0
    %v1765 = vsel %vm1733, 1, 0
    %v1766 = vsel %vm1734, 1, 0
    %v1767 = vsel %vm1735, 1, 0
    %v1768 = vsel %vm1736, 1, 0
    %v1769 = vsel %vm1737, 1, 0
    %v1770 = vsel %vm1738, 1, 0
    %v1771 = vsel %vm1739, 1, 0
    %v1772 = vsel %vm1740, 1, 0
    %v1773 = vsel %vm1741, 1, 0
    %v1774 = vsel %vm1742, 1, 0
    %v1775 = vsel %vm1743, 1, 0
    %v1776 = vcvt.s32.f32 %v1744
    %v1777 = vcvt.s32.f32 %v1745
    %v1778 = vcvt.s32.f32 %v1746
    %v1779 = vcvt.s32.f32 %v1747
    %v1780 = vcvt.s32.f32 %v1748
    %v1781 = vcvt.s32.f32 %v1749
    %v1782 = vcvt.s32.f32 %v1750
    %v1783 = vcvt.s32.f32 %v1751
    %v1784 = vcvt.s32.f32 %v1752
    %v1785 = vcvt.s32.f32 %v1753
    %v1786 = vcvt.s32.f32 %v1754
    %v1787 = vcvt.s32.f32 %v1755
    %v1788 = vcvt.s32.f32 %v1756
    %v1789 = vcvt.s32.f32 %v1757
    %v1790 = vcvt.s32.f32 %v1758
    %v1791 = vcvt.s32.f32 %v1759
    %v1792 = vcvt.s32.f32 %v1760
    %v1793 = vcvt.s32.f32 %v1761
    %v1794 = vcvt.s32.f32 %v1762
    %v1795 = vcvt.s32.f32 %v1763
    %v1796 = vcvt.s32.f32 %v1764
    %v1797 = vcvt.s32.f32 %v1765
    %v1798 = vcvt.s32.f32 %v1766
    %v1799 = vcvt.s32.f32 %v1767
    %v1800 = vcvt.s32.f32 %v1768
    %v1801 = vcvt.s32.f32 %v1769
    %v1802 = vcvt.s32.f32 %v1770
    %v1803 = vcvt.s32.f32 %v1771
    %v1804 = vcvt.s32.f32 %v1772
    %v1805 = vcvt.s32.f32 %v1773
    %v1806 = vcvt.s32.f32 %v1774
    %v1807 = vcvt.s32.f32 %v1775
    %v1808 = vld [vmem:[#allocation2 + $0x2] sm:$0x3]
    %v1809 = vadd.f32 %v1776, %v1778
    %v1810 = vadd.f32 %v1809, %v1780
    %v1811 = vadd.f32 %v1810, %v1782
    %v1812 = vadd.f32 %v1811, %v1784
    %v1813 = vadd.f32 %v1812, %v1786
    %v1814 = vadd.f32 %v1813, %v1788
    %v1815 = vadd.f32 %v1814, %v1790
    %v1816 = vadd.f32 %v1815, %v1792
    %v1817 = vadd.f32 %v1816, %v1794
    %v1818 = vadd.f32 %v1817, %v1796
    %v1819 = vadd.f32 %v1818, %v1798
    %v1820 = vadd.f32 %v1819, %v1800
    %v1821 = vadd.f32 %v1820, %v1802
    %v1822 = vadd.f32 %v1821, %v1804
    %v1823 = vadd.f32 %v1822, %v1806
    %v1824 = vrot.slane %v1823, 4
    %v1825 = vadd.f32 %v1823, %v1824
    %v1826 = vrot.slane %v1825, 2
    %v1827 = vadd.f32 %v1825, %v1826
    %v1828 = vrot.slane %v1827, 1
    %v1829 = vadd.f32 %v1827, %v1828
    %v1830 = vadd.f32 %v1777, %v1779
    %v1831 = vadd.f32 %v1830, %v1781
    %v1832 = vadd.f32 %v1831, %v1783
    %v1833 = vadd.f32 %v1832, %v1785
    %v1834 = vadd.f32 %v1833, %v1787
    %v1835 = vadd.f32 %v1834, %v1789
    %v1836 = vadd.f32 %v1835, %v1791
    %v1837 = vadd.f32 %v1836, %v1793
    %v1838 = vadd.f32 %v1837, %v1795
    %v1839 = vadd.f32 %v1838, %v1797
    %v1840 = vadd.f32 %v1839, %v1799
    %v1841 = vadd.f32 %v1840, %v1801
    %v1842 = vadd.f32 %v1841, %v1803
    %v1843 = vadd.f32 %v1842, %v1805
    %v1844 = vadd.f32 %v1843, %v1807
    %v1845 = vrot.slane %v1844, 4
    %v1846 = vadd.f32 %v1844, %v1845
    %v1847 = vrot.slane %v1846, 2
    %v1848 = vadd.f32 %v1846, %v1847
    %v1849 = vrot.slane %v1848, 1
    %v1850 = vadd.f32 %v1848, %v1849
    %v1853 = vrot.slane %v1850, 7
    %v1854 = vsel %vm1478, %v1829, %v1853
    %v1856 = vadd.f32 %v1808, %v1854
    %1857 = vst.msk [vmem:[#allocation2 + $0x2] sm:$0x3] %vm1485, %v1856
    %v1858 = vpack.c.bf16 %v1778, %v1776
    %v1859 = vpack.c.bf16 %v1779, %v1777
    %v1860 = vpack.c.bf16 %v1782, %v1780
    %v1861 = vpack.c.bf16 %v1783, %v1781
    %v1862 = vpack.c.bf16 %v1786, %v1784
    %v1863 = vpack.c.bf16 %v1787, %v1785
    %v1864 = vpack.c.bf16 %v1790, %v1788
    %v1865 = vpack.c.bf16 %v1791, %v1789
    %v1866 = vpack.c.bf16 %v1794, %v1792
    %v1867 = vpack.c.bf16 %v1795, %v1793
    %v1868 = vpack.c.bf16 %v1798, %v1796
    %v1869 = vpack.c.bf16 %v1799, %v1797
    %v1870 = vpack.c.bf16 %v1802, %v1800
    %v1871 = vpack.c.bf16 %v1803, %v1801
    %v1872 = vpack.c.bf16 %v1806, %v1804
    %v1873 = vpack.c.bf16 %v1807, %v1805
    %1874 = vxpose.binary.xlu0.c.b16.start [1/16] %v1859, %v1858, 128
    %1875 = vxpose.binary.xlu0.c.b16.cont [2/16] %v1861, %v1860, 128
    %1876 = vxpose.binary.xlu0.c.b16.cont [3/16] %v1863, %v1862, 128
    %1877 = vxpose.binary.xlu0.c.b16.cont [4/16] %v1865, %v1864, 128
    %1878 = vxpose.binary.xlu0.c.b16.cont [5/16] %v1867, %v1866, 128
    %1879 = vxpose.binary.xlu0.c.b16.cont [6/16] %v1869, %v1868, 128
    %1880 = vxpose.binary.xlu0.c.b16.cont [7/16] %v1871, %v1870, 128
    %1881 = vxpose.binary.xlu0.c.b16.end [8/16] %v1873, %v1872, 128
    %v1882 = vpop.trf.xlu0
    %v1883 = vpop.trf.xlu0
    %v1884 = vpop.trf.xlu0
    %v1885 = vpop.trf.xlu0
    %v1886 = vpop.trf.xlu0
    %v1887 = vpop.trf.xlu0
    %v1888 = vpop.trf.xlu0
    %v1889 = vpop.trf.xlu0
    %v1890 = vpop.trf.xlu0
    %v1891 = vpop.trf.xlu0
    %v1892 = vpop.trf.xlu0
    %v1893 = vpop.trf.xlu0
    %v1894 = vpop.trf.xlu0
    %v1895 = vpop.trf.xlu0
    %v1896 = vpop.trf.xlu0
    %v1897 = vpop.trf.xlu0
    %1898 = vmatpush.bf16.msra.mxu0 %v152
    %1899 = vmatpush.bf16.msra.mxu0 %v151
    %1900 = vmatpush.bf16.msra.mxu0 %v150
    %1901 = vmatpush.bf16.msra.mxu0 %v149
    %1902 = vmatpush.bf16.msra.mxu0 %v148
    %1903 = vmatpush.bf16.msra.mxu0 %v147
    %1904 = vmatpush.bf16.msra.mxu0 %v146
    %1905 = vmatpush.bf16.msra.mxu0 %v145
    %1906 = vmatmul.bf16.gmra.mxu0 %v1882
    %v1907 = vpop.f32.mrf.mxu0
    %v1908 = vadd.f32 0.0, %v1907
    %v1909 = vpop.f32.mrf.mxu0
    %v1910 = vadd.f32 0.0, %v1909
    %1911 = vmatmul.bf16.gmra.mxu0 %v1884
    %v1912 = vpop.f32.mrf.mxu0
    %v1913 = vadd.f32 0.0, %v1912
    %v1914 = vpop.f32.mrf.mxu0
    %v1915 = vadd.f32 0.0, %v1914
    %1916 = vmatmul.bf16.gmra.mxu0 %v1886
    %v1917 = vpop.f32.mrf.mxu0
    %v1918 = vadd.f32 0.0, %v1917
    %v1919 = vpop.f32.mrf.mxu0
    %v1920 = vadd.f32 0.0, %v1919
    %1921 = vmatmul.bf16.gmra.mxu0 %v1888
    %v1922 = vpop.f32.mrf.mxu0
    %v1923 = vadd.f32 0.0, %v1922
    %v1924 = vpop.f32.mrf.mxu0
    %v1925 = vadd.f32 0.0, %v1924
    %1926 = vmatmul.bf16.gmra.mxu0 %v1890
    %v1927 = vpop.f32.mrf.mxu0
    %v1928 = vadd.f32 0.0, %v1927
    %v1929 = vpop.f32.mrf.mxu0
    %v1930 = vadd.f32 0.0, %v1929
    %1931 = vmatmul.bf16.gmra.mxu0 %v1892
    %v1932 = vpop.f32.mrf.mxu0
    %v1933 = vadd.f32 0.0, %v1932
    %v1934 = vpop.f32.mrf.mxu0
    %v1935 = vadd.f32 0.0, %v1934
    %1936 = vmatmul.bf16.gmra.mxu0 %v1894
    %v1937 = vpop.f32.mrf.mxu0
    %v1938 = vadd.f32 0.0, %v1937
    %v1939 = vpop.f32.mrf.mxu0
    %v1940 = vadd.f32 0.0, %v1939
    %1941 = vmatmul.bf16.gmra.mxu0 %v1896
    %v1942 = vpop.f32.mrf.mxu0
    %v1943 = vadd.f32 0.0, %v1942
    %v1944 = vpop.f32.mrf.mxu0
    %v1945 = vadd.f32 0.0, %v1944
    %1946 = vmatmul.bf16.gmra.mxu0 %v1883
    %v1947 = vpop.f32.mrf.mxu0
    %v1948 = vadd.f32 0.0, %v1947
    %v1949 = vpop.f32.mrf.mxu0
    %v1950 = vadd.f32 0.0, %v1949
    %1951 = vmatmul.bf16.gmra.mxu0 %v1885
    %v1952 = vpop.f32.mrf.mxu0
    %v1953 = vadd.f32 0.0, %v1952
    %v1954 = vpop.f32.mrf.mxu0
    %v1955 = vadd.f32 0.0, %v1954
    %1956 = vmatmul.bf16.gmra.mxu0 %v1887
    %v1957 = vpop.f32.mrf.mxu0
    %v1958 = vadd.f32 0.0, %v1957
    %v1959 = vpop.f32.mrf.mxu0
    %v1960 = vadd.f32 0.0, %v1959
    %1961 = vmatmul.bf16.gmra.mxu0 %v1889
    %v1962 = vpop.f32.mrf.mxu0
    %v1963 = vadd.f32 0.0, %v1962
    %v1964 = vpop.f32.mrf.mxu0
    %v1965 = vadd.f32 0.0, %v1964
    %1966 = vmatmul.bf16.gmra.mxu0 %v1891
    %v1967 = vpop.f32.mrf.mxu0
    %v1968 = vadd.f32 0.0, %v1967
    %v1969 = vpop.f32.mrf.mxu0
    %v1970 = vadd.f32 0.0, %v1969
    %1971 = vmatmul.bf16.gmra.mxu0 %v1893
    %v1972 = vpop.f32.mrf.mxu0
    %v1973 = vadd.f32 0.0, %v1972
    %v1974 = vpop.f32.mrf.mxu0
    %v1975 = vadd.f32 0.0, %v1974
    %1976 = vmatmul.bf16.gmra.mxu0 %v1895
    %v1977 = vpop.f32.mrf.mxu0
    %v1978 = vadd.f32 0.0, %v1977
    %v1979 = vpop.f32.mrf.mxu0
    %v1980 = vadd.f32 0.0, %v1979
    %1981 = vmatmul.bf16.gmra.mxu0 %v1897
    %v1982 = vpop.f32.mrf.mxu0
    %v1983 = vadd.f32 0.0, %v1982
    %v1984 = vpop.f32.mrf.mxu0
    %v1985 = vadd.f32 0.0, %v1984
    %1986 = vdwg.mxu0
    %v1987 = vld [vmem:[%s4 + $0x100] sm:$0xff]
    %v1988 = vld [vmem:[%s4 + $0x108] sm:$0xff]
    %v1989 = vld [vmem:[%s4 + $0x110] sm:$0xff]
    %v1990 = vld [vmem:[%s4 + $0x118] sm:$0xff]
    %v1991 = vld [vmem:[%s4 + $0x120] sm:$0xff]
    %v1992 = vld [vmem:[%s4 + $0x128] sm:$0xff]
    %v1993 = vld [vmem:[%s4 + $0x130] sm:$0xff]
    %v1994 = vld [vmem:[%s4 + $0x138] sm:$0xff]
    %v1995 = vld [vmem:[%s4 + $0x140] sm:$0xff]
    %v1996 = vld [vmem:[%s4 + $0x148] sm:$0xff]
    %v1997 = vld [vmem:[%s4 + $0x150] sm:$0xff]
    %v1998 = vld [vmem:[%s4 + $0x158] sm:$0xff]
    %v1999 = vld [vmem:[%s4 + $0x160] sm:$0xff]
    %v2000 = vld [vmem:[%s4 + $0x168] sm:$0xff]
    %v2001 = vld [vmem:[%s4 + $0x170] sm:$0xff]
    %v2002 = vld [vmem:[%s4 + $0x178] sm:$0xff]
    %v2003 = vld [vmem:[%s4 + $0x180] sm:$0xff]
    %v2004 = vld [vmem:[%s4 + $0x188] sm:$0xff]
    %v2005 = vld [vmem:[%s4 + $0x190] sm:$0xff]
    %v2006 = vld [vmem:[%s4 + $0x198] sm:$0xff]
    %v2007 = vld [vmem:[%s4 + $0x1a0] sm:$0xff]
    %v2008 = vld [vmem:[%s4 + $0x1a8] sm:$0xff]
    %v2009 = vld [vmem:[%s4 + $0x1b0] sm:$0xff]
    %v2010 = vld [vmem:[%s4 + $0x1b8] sm:$0xff]
    %v2011 = vld [vmem:[%s4 + $0x1c0] sm:$0xff]
    %v2012 = vld [vmem:[%s4 + $0x1c8] sm:$0xff]
    %v2013 = vld [vmem:[%s4 + $0x1d0] sm:$0xff]
    %v2014 = vld [vmem:[%s4 + $0x1d8] sm:$0xff]
    %v2015 = vld [vmem:[%s4 + $0x1e0] sm:$0xff]
    %v2016 = vld [vmem:[%s4 + $0x1e8] sm:$0xff]
    %v2017 = vld [vmem:[%s4 + $0x1f0] sm:$0xff]
    %v2018 = vld [vmem:[%s4 + $0x1f8] sm:$0xff]
    %v2019 = vadd.f32 %v1987, %v1908
    %v2020 = vadd.f32 %v1988, %v1910
    %v2021 = vadd.f32 %v1989, %v1913
    %v2022 = vadd.f32 %v1990, %v1915
    %v2023 = vadd.f32 %v1991, %v1918
    %v2024 = vadd.f32 %v1992, %v1920
    %v2025 = vadd.f32 %v1993, %v1923
    %v2026 = vadd.f32 %v1994, %v1925
    %v2027 = vadd.f32 %v1995, %v1928
    %v2028 = vadd.f32 %v1996, %v1930
    %v2029 = vadd.f32 %v1997, %v1933
    %v2030 = vadd.f32 %v1998, %v1935
    %v2031 = vadd.f32 %v1999, %v1938
    %v2032 = vadd.f32 %v2000, %v1940
    %v2033 = vadd.f32 %v2001, %v1943
    %v2034 = vadd.f32 %v2002, %v1945
    %v2035 = vadd.f32 %v2003, %v1948
    %v2036 = vadd.f32 %v2004, %v1950
    %v2037 = vadd.f32 %v2005, %v1953
    %v2038 = vadd.f32 %v2006, %v1955
    %v2039 = vadd.f32 %v2007, %v1958
    %v2040 = vadd.f32 %v2008, %v1960
    %v2041 = vadd.f32 %v2009, %v1963
    %v2042 = vadd.f32 %v2010, %v1965
    %v2043 = vadd.f32 %v2011, %v1968
    %v2044 = vadd.f32 %v2012, %v1970
    %v2045 = vadd.f32 %v2013, %v1973
    %v2046 = vadd.f32 %v2014, %v1975
    %v2047 = vadd.f32 %v2015, %v1978
    %v2048 = vadd.f32 %v2016, %v1980
    %v2049 = vadd.f32 %v2017, %v1983
    %v2050 = vadd.f32 %v2018, %v1985
    %2051 = vst.msk [vmem:[%s4 + $0x100] sm:$0xff] %vm201, %v2019
    %2052 = vst.msk [vmem:[%s4 + $0x108] sm:$0xff] %vm201, %v2020
    %2053 = vst.msk [vmem:[%s4 + $0x110] sm:$0xff] %vm201, %v2021
    %2054 = vst.msk [vmem:[%s4 + $0x118] sm:$0xff] %vm201, %v2022
    %2055 = vst.msk [vmem:[%s4 + $0x120] sm:$0xff] %vm201, %v2023
    %2056 = vst.msk [vmem:[%s4 + $0x128] sm:$0xff] %vm201, %v2024
    %2057 = vst.msk [vmem:[%s4 + $0x130] sm:$0xff] %vm201, %v2025
    %2058 = vst.msk [vmem:[%s4 + $0x138] sm:$0xff] %vm201, %v2026
    %2059 = vst.msk [vmem:[%s4 + $0x140] sm:$0xff] %vm201, %v2027
    %2060 = vst.msk [vmem:[%s4 + $0x148] sm:$0xff] %vm201, %v2028
    %2061 = vst.msk [vmem:[%s4 + $0x150] sm:$0xff] %vm201, %v2029
    %2062 = vst.msk [vmem:[%s4 + $0x158] sm:$0xff] %vm201, %v2030
    %2063 = vst.msk [vmem:[%s4 + $0x160] sm:$0xff] %vm201, %v2031
    %2064 = vst.msk [vmem:[%s4 + $0x168] sm:$0xff] %vm201, %v2032
    %2065 = vst.msk [vmem:[%s4 + $0x170] sm:$0xff] %vm201, %v2033
    %2066 = vst.msk [vmem:[%s4 + $0x178] sm:$0xff] %vm201, %v2034
    %2067 = vst.msk [vmem:[%s4 + $0x180] sm:$0xff] %vm201, %v2035
    %2068 = vst.msk [vmem:[%s4 + $0x188] sm:$0xff] %vm201, %v2036
    %2069 = vst.msk [vmem:[%s4 + $0x190] sm:$0xff] %vm201, %v2037
    %2070 = vst.msk [vmem:[%s4 + $0x198] sm:$0xff] %vm201, %v2038
    %2071 = vst.msk [vmem:[%s4 + $0x1a0] sm:$0xff] %vm201, %v2039
    %2072 = vst.msk [vmem:[%s4 + $0x1a8] sm:$0xff] %vm201, %v2040
    %2073 = vst.msk [vmem:[%s4 + $0x1b0] sm:$0xff] %vm201, %v2041
    %2074 = vst.msk [vmem:[%s4 + $0x1b8] sm:$0xff] %vm201, %v2042
    %2075 = vst.msk [vmem:[%s4 + $0x1c0] sm:$0xff] %vm201, %v2043
    %2076 = vst.msk [vmem:[%s4 + $0x1c8] sm:$0xff] %vm201, %v2044
    %2077 = vst.msk [vmem:[%s4 + $0x1d0] sm:$0xff] %vm201, %v2045
    %2078 = vst.msk [vmem:[%s4 + $0x1d8] sm:$0xff] %vm201, %v2046
    %2079 = vst.msk [vmem:[%s4 + $0x1e0] sm:$0xff] %vm201, %v2047
    %2080 = vst.msk [vmem:[%s4 + $0x1e8] sm:$0xff] %vm201, %v2048
    %2081 = vst.msk [vmem:[%s4 + $0x1f0] sm:$0xff] %vm201, %v2049
    %2082 = vst.msk [vmem:[%s4 + $0x1f8] sm:$0xff] %vm201, %v2050
    %s2083 = sadd.s32 0, 0
    %s2084 = smul.u32 16, %s2083
    %p2085 = scmp.lt.s32.totalorder %s2084, 15
    %s2086 = scalar_select %p2085, %s2084, 15
    %s2087 = smul.addr %s2086, 8
    %s2088 = scalar_lea.vmem %s3, %s2087
    // Predicated region
    $region18: #{tpu_custom_call.1} parent=1 // pred_check
      _
    $region19: #{tpu_custom_call.1} parent=1 // pred_check_branch
      %2090 = sbr.rel (0) target = $region21
    $region20: #{tpu_custom_call.1} parent=1 // pred_region
      %s2091 = sadd.s32 0, 0
      %s2092 = smul.u32 16, %s2091
    $region21: #{tpu_custom_call.1} parent=1 // pred_fallthru
      _
    // Predicated region
    $region22: #{tpu_custom_call.1} parent=1 // pred_check
      _
    $region23: #{tpu_custom_call.1} parent=1 // pred_check_branch
      %2094 = sbr.rel (0) target = $region25
    $region24: #{tpu_custom_call.1} parent=1 // pred_region
      _
    $region25: #{tpu_custom_call.1} parent=1 // pred_fallthru
      _
    // Predicated region
    $region26: #{tpu_custom_call.1} parent=1 // pred_check
      _
    $region27: #{tpu_custom_call.1} parent=1 // pred_check_branch
      %2096 = sbr.rel (0) target = $region29
    $region28: #{tpu_custom_call.1} parent=1 // pred_region
      %2098 = vsyncadd [#allocation3], 0
      %s2100 = sshll.u32 [#allocation2], 4
      %s2101 = int_to_ptr.vmem [resolvable:$true] %s2100
      %s2102 = sshll.u32 %s5, 4
      %s2103 = int_to_ptr.hbm [resolvable:$true] %s2102
      %2105 = dma.vmem_to_hbm [thread:$0]  %s2101, 64, %s2103, [#allocation3]
    $region29: #{tpu_custom_call.1} parent=1 // pred_fallthru
      _
    // Predicated region
    $region30: #{tpu_custom_call.1} parent=1 // pred_check
      _
    $region31: #{tpu_custom_call.1} parent=1 // pred_check_branch
      %2107 = sbr.rel (0) target = $region33
    $region32: #{tpu_custom_call.1} parent=1 // pred_region
      %s2108 = sadd.s32 0, 0
      %s2109 = smul.u32 16, %s2108
      %p2110 = scmp.lt.s32.totalorder %s2109, 15
      %s2111 = scalar_select %p2110, %s2109, 15
      %s2112 = smul.addr %s2111, 8
      %s2113 = scalar_lea.vmem %s3, %s2112
    $region33: #{tpu_custom_call.1} parent=1 // pred_fallthru
      _
    // Predicated region
    $region34: #{tpu_custom_call.1} parent=1 // pred_check
      _
    $region35: #{tpu_custom_call.1} parent=1 // pred_check_branch
      %2115 = sbr.rel (0) target = $region37
    $region36: #{tpu_custom_call.1} parent=1 // pred_region
      _
    $region37: #{tpu_custom_call.1} parent=1 // pred_fallthru
      _
    // Predicated region
    $region38: #{tpu_custom_call.1} parent=1 // pred_check
      _
    $region39: #{tpu_custom_call.1} parent=1 // pred_check_branch
      %2117 = sbr.rel (0) target = $region41
    $region40: #{tpu_custom_call.1} parent=1 // pred_region
      %2119 = dma.done [#allocation3], 64
    $region41: #{tpu_custom_call.1} parent=1 // pred_fallthru
      _
    %2120 = vsyncpa [#allocation3], 1

</llo_original>
